<compile_context>
chip_gen: v7x
topology: tpu7x:2x2x1
jax: 0.10.0
libtpu: 0.0.40
codegen_flags: <defaults>
</compile_context>

<pallas_src>
import functools

import jax
import jax.numpy as jnp
from jax.experimental import pallas as pl
from jax.experimental.pallas import tpu as pltpu

# ----------------------------- hyperparameters ------------------------------
WORD_VEC_DIM = 32          # hp.word_vec_dim
ENERGY_CHANNELS = 8        # hp.energy_output_channel
DECODER_OUT_CHANNELS = 24  # decoder acoustic-feature output channels
DECODER_HIDDEN = 64
VOCAB = 40

B = 2
T_SRC = 8                  # number of phonemes
T_OUT = 192                # dis_pos.shape[1] (padded frame length)

COND_WIDTH = 8             # rows: [dis_pos, f0, for_mask, g_bias, 0, 0, 0, 0]

MXU_DTYPE = jnp.bfloat16   # MXU operand dtype (f32 accumulation everywhere)

BIN_LO = -4.0
BIN_HI = 4.0
BIN_STEP = (BIN_HI - BIN_LO) / 256.0      # 0.03125 (bins are exact in bf16)
BIN_INV_STEP = 1.0 / BIN_STEP             # 32.0


def _bin_energy_enc(x):
    # TODO(synk): reference bin_energy_enc not provided; deterministic uniform
    # quantization (detach + bin) standing in for the energy binning encoder.
    x = jnp.clip(x, BIN_LO, BIN_HI - 1e-6)
    return jnp.floor((x - BIN_LO) * BIN_INV_STEP) * BIN_STEP + BIN_LO


def _round_up(x, m):
    return (x + m - 1) // m * m


def _pick_frame_tile(n):
    """Frame-tile (lane) width: >=128, grows once there is enough work to
    amortize MXU weight pushes, stays small enough to bound padding waste
    and per-step VMEM (v5e 16 MiB / v7x 32 MiB scoped defaults)."""
    if n >= 4 * 512:
        return 512
    if n >= 4 * 256:
        return 256
    return 128


# ------------------------------ fused kernel --------------------------------
def _fastnpss_fused_kernel(use_ext_energy, *refs):
    """Fused FastNPSS forward on one frame tile.

    Layout: channels-in-sublanes / frames-in-lanes; every activation is
    (channels, tile_n) so all elementwise ops and output stores are
    lane-dense.  Weights are resident (constant index_map) across the grid.
    """
    if use_ext_energy:
        (cond_ref, enc_in_ref, lohi_ref, enc_w_ref, cond_w_ref, w1s_ref,
         ep_w2_ref, dec_w2_ref, ee_w_ref, bias_ref, energy_ext_ref,
         dec_out_ref, energy_out_ref) = refs
    else:
        (cond_ref, enc_in_ref, lohi_ref, enc_w_ref, cond_w_ref, w1s_ref,
         ep_w2_ref, dec_w2_ref, ee_w_ref, bias_ref,
         dec_out_ref, energy_out_ref) = refs
        energy_ext_ref = None

    f32 = jnp.float32
    tile_n = dec_out_ref.shape[1]
    d = ee_w_ref.shape[0]              # word_vec_dim
    hid = ep_w2_ref.shape[1]           # decoder hidden width
    e_ch = ep_w2_ref.shape[0]          # energy channels
    dec_ch = dec_w2_ref.shape[0]       # decoder output channels
    m_pad = enc_in_ref.shape[1]        # padded #phonemes (B * T_src)

    # Bias-slab offsets: [enc_b | ep_b1 | ep_b2 | ee_b | dec_b1 | dec_b2]
    # (all 8-aligned for D=32, H=64, E=8, DEC=24).
    off_enc_b = 0
    off_ep_b1 = d
    off_ep_b2 = d + hid
    off_ee_b = d + hid + e_ch
    off_dec_b1 = 2 * d + hid + e_ch
    off_dec_b2 = 2 * d + 2 * hid + e_ch

    # ---- Encoder projection (stand-in for the Encoder FFT-block stack) -----
    # TODO(synk): reference Encoder definition was not provided.
    enc = (jnp.dot(enc_w_ref[...], enc_in_ref[...], preferred_element_type=f32)
           + bias_ref[off_enc_b:off_enc_b + d, :])            # (D, m_pad)
    enc = enc.astype(MXU_DTYPE)

    # ---- Length regulator: expand() + util.pad() as a per-tile one-hot
    # selection matmul.  Flat frame r copies phoneme c iff lo[c] <= r < hi[c];
    # frames past the last phoneme (and lane padding) select nothing -> zeros.
    # TODO(synk): at production lengths replace with a scalar-prefetch gather.
    base = pl.program_id(0) * tile_n
    frame = (base + jax.lax.broadcasted_iota(jnp.int32, (m_pad, tile_n), 1)
             ).astype(f32)
    lo = lohi_ref[0:m_pad, :]                                  # (m_pad, 1)
    hi = lohi_ref[m_pad:2 * m_pad, :]
    sel = ((frame >= lo) & (frame < hi)).astype(f32).astype(MXU_DTYPE)
    r_out = jnp.dot(enc, sel, preferred_element_type=f32)      # (D, tile_n)

    # ---- Fused conditioning: ONE (3D, 8) @ (8, tile_n) dot giving
    #      [for_mask broadcast | energy-pred cond | decoder cond] stacked.
    cond_all = jnp.dot(cond_w_ref[...], cond_ref[...].astype(MXU_DTYPE),
                       preferred_element_type=f32)             # (3D, tile_n)
    mask = cond_all[0:d, :]                                    # exact 0/1 rows
    ep_cond = cond_all[d:2 * d, :]
    dec_cond = cond_all[2 * d:3 * d, :]

    w1s = w1s_ref[...]                                         # (2H, D) bf16

    def decoder_block(x, cond_d, w1, b1, w2, b2, out_ch):
        # TODO(synk): reference Decoder (FFT blocks / attention with g_bias)
        # was not provided; conditioned masked 2-layer MLP stand-in.
        h = ((x + cond_d) * mask).astype(MXU_DTYPE)            # (D, tile_n)
        h1 = jnp.dot(w1, h, preferred_element_type=f32) + b1   # (H, tile_n)
        h1 = jnp.maximum(h1, 0.0).astype(MXU_DTYPE)
        y = jnp.dot(w2, h1, preferred_element_type=f32) + b2   # (out, tile_n)
        return y * mask[0:out_ch, :]

    # ---- Energy predictor -> (E, tile_n) -----------------------------------
    energy_pred = decoder_block(
        r_out, ep_cond,
        w1s[0:hid, :], bias_ref[off_ep_b1:off_ep_b1 + hid, :],
        ep_w2_ref[...], bias_ref[off_ep_b2:off_ep_b2 + e_ch, :], e_ch)

    # ---- bin_energy_enc + energy embedding -> (D, tile_n) -------------------
    e_src = energy_ext_ref[...] if use_ext_energy else energy_pred
    e_src = _bin_energy_enc(e_src).astype(MXU_DTYPE)   # bin values exact in bf16
    e_emb = (jnp.dot(ee_w_ref[...], e_src, preferred_element_type=f32)
             + bias_ref[off_ee_b:off_ee_b + d, :])

    # ---- Final decoder -> (DEC, tile_n) -------------------------------------
    dec = decoder_block(
        r_out + e_emb, dec_cond,
        w1s[hid:2 * hid, :], bias_ref[off_dec_b1:off_dec_b1 + hid, :],
        dec_w2_ref[...], bias_ref[off_dec_b2:off_dec_b2 + dec_ch, :], dec_ch)

    # Two lane-dense (128-multiple wide) stores.
    dec_out_ref[...] = dec.astype(dec_out_ref.dtype)
    energy_out_ref[...] = energy_pred.astype(energy_out_ref.dtype)


# ------------------------------ parameter init ------------------------------
def init_params(key):
    ks = list(jax.random.split(key, 5))

    def dense(k, din, dout):
        kw, kb = jax.random.split(k)
        scale = 1.0 / jnp.sqrt(jnp.float32(din))
        return (jax.random.normal(kw, (din, dout), jnp.float32) * scale,
                jax.random.normal(kb, (1, dout), jnp.float32) * 0.01)

    def decoder_params(k, din, hidden, dout):
        k1, k2, k3, k4 = jax.random.split(k, 4)
        w1, b1 = dense(k1, din, hidden)
        w2, b2 = dense(k2, hidden, dout)
        return {"wp": jax.random.normal(k3, (1, din), jnp.float32) * 0.1,
                "wf": jax.random.normal(k4, (1, din), jnp.float32) * 0.1,
                "w1": w1, "b1": b1, "w2": w2, "b2": b2}

    emb = jax.random.normal(ks[0], (VOCAB, WORD_VEC_DIM), jnp.float32) * 0.1
    we, be = dense(ks[1], WORD_VEC_DIM, WORD_VEC_DIM)            # encoder proj
    wee, bee = dense(ks[2], ENERGY_CHANNELS, WORD_VEC_DIM)       # energy_embeding
    return {"emb": emb, "enc_w": we, "enc_b": be,
            "energy_emb_w": wee, "energy_emb_b": bee,
            "energy_predictor": decoder_params(
                ks[3], WORD_VEC_DIM, DECODER_HIDDEN, ENERGY_CHANNELS),
            "decoder": decoder_params(
                ks[4], WORD_VEC_DIM, DECODER_HIDDEN, DECODER_OUT_CHANNELS)}


def prepare_kernel_params(params):
    """One-time repack of nn.Linear-shaped params into the kernel's
    channels-in-sublanes layout: weights transposed and cast to MXU_DTYPE,
    all biases in one f32 slab, the three conditioning projections fused
    into a single (3D, COND_WIDTH) matrix."""
    d, hid = WORD_VEC_DIM, DECODER_HIDDEN
    e_ch, dec_ch = ENERGY_CHANNELS, DECODER_OUT_CHANNELS
    assert max(e_ch, dec_ch) <= d, "mask rows are reused for output masking"
    ep, dc = params["energy_predictor"], params["decoder"]

    cond_w = jnp.zeros((3 * d, COND_WIDTH), jnp.float32)
    cond_w = cond_w.at[0:d, 2].set(1.0)               # rows 0:D   -> for_mask
    cond_w = cond_w.at[d:2 * d, 0].set(ep["wp"][0])   # rows D:2D  -> ep cond
    cond_w = cond_w.at[d:2 * d, 1].set(ep["wf"][0])
    cond_w = cond_w.at[d:2 * d, 3].set(1.0)           # + g_bias
    cond_w = cond_w.at[2 * d:, 0].set(dc["wp"][0])    # rows 2D:3D -> dec cond
    cond_w = cond_w.at[2 * d:, 1].set(dc["wf"][0])
    cond_w = cond_w.at[2 * d:, 3].set(1.0)

    biases = jnp.concatenate(
        [params["enc_b"][0], ep["b1"][0], ep["b2"][0],
         params["energy_emb_b"][0], dc["b1"][0], dc["b2"][0]]).reshape(-1, 1)

    mx = MXU_DTYPE
    return {
        "emb": params["emb"],
        "enc_w_t": params["enc_w"].T.astype(mx),                        # (D, D)
        "cond_w": cond_w.astype(mx),                                    # (3D, 8)
        "w1s": jnp.concatenate([ep["w1"].T, dc["w1"].T], 0).astype(mx), # (2H, D)
        "ep_w2": ep["w2"].T.astype(mx),                                 # (E, H)
        "dec_w2": dc["w2"].T.astype(mx),                                # (DEC, H)
        "ee_w": params["energy_emb_w"].T.astype(mx),                    # (D, E)
        "biases": biases.astype(jnp.float32),                           # (224, 1)
    }


# ------------------------------ FastNPSS forward -----------------------------
@jax.jit
def fast_npss_forward(kparams, src_seq, phn_count, dis_pos, f0, for_mask,
                      g_bias, energy=None):
    f32 = jnp.float32
    b, t_src = src_seq.shape
    t_out = dis_pos.shape[1]
    d = kparams["enc_w_t"].shape[0]
    hid = kparams["ep_w2"].shape[1]
    e_ch = kparams["ep_w2"].shape[0]
    dec_ch = kparams["dec_w2"].shape[0]

    n = b * t_out                              # flat frame count
    m = b * t_src                              # flat phoneme count
    m_pad = _round_up(m, 8)
    tile_n = _pick_frame_tile(n)
    n_pad = _round_up(n, tile_n)
    grid = (n_pad // tile_n,)

    # Embedding lookup (Encoder front-end) stays an XLA gather.
    # TODO(synk): could move in-kernel via scalar-prefetch + pl.Element gather.
    enc_rows = kparams["emb"][src_seq].reshape(m, d)
    enc_in_t = (jnp.zeros((d, m_pad), MXU_DTYPE)
                .at[:, :m].set(enc_rows.T.astype(MXU_DTYPE)))

    # Length-regulator [lo, hi) intervals in global flat-frame coordinates.
    # hi is clipped at T_out (truncation semantics); frames past the last
    # phoneme / lane padding select nothing.
    pc = phn_count.astype(f32)
    csum = jnp.cumsum(pc, axis=1)
    start = csum - pc
    off = (jnp.arange(b, dtype=f32) * float(t_out))[:, None]
    lo = (off + start).reshape(m)
    hi = (off + jnp.minimum(csum, float(t_out))).reshape(m)
    lohi = (jnp.zeros((2 * m_pad,), f32)
            .at[:m].set(lo).at[m_pad:m_pad + m].set(hi)).reshape(2 * m_pad, 1)

    # Conditioning signals packed frames-in-lanes: rows [pos, f0, mask, g_bias].
    cond4 = jnp.concatenate([dis_pos, f0, for_mask, g_bias], axis=-1)  # (B,T,4)
    cond = (jnp.zeros((COND_WIDTH, n_pad), f32)
            .at[:4, :n].set(cond4.reshape(n, 4).T))

    inputs = [cond, enc_in_t, lohi,
              kparams["enc_w_t"], kparams["cond_w"], kparams["w1s"],
              kparams["ep_w2"], kparams["dec_w2"], kparams["ee_w"],
              kparams["biases"]]

    def tiled(rows):                       # frame-tiled along the lane axis
        return pl.BlockSpec((rows, tile_n), lambda i: (0, i))

    def resident(x):                       # VMEM-resident across all steps
        return pl.BlockSpec(x.shape, lambda i: (0, 0))

    in_specs = [tiled(COND_WIDTH)] + [resident(x) for x in inputs[1:]]

    use_ext = energy is not None
    if use_ext:
        e_t = (jnp.zeros((e_ch, n_pad), f32)
               .at[:, :n].set(energy.reshape(n, e_ch).T))
        inputs.append(e_t)
        in_specs.append(tiled(e_ch))

    # Advisory cost estimate for the XLA scheduler.
    flops_per_frame = (2 * d * m_pad + 2 * 3 * d * COND_WIDTH
                       + 2 * (2 * hid * d) + 2 * hid * (e_ch + dec_ch)
                       + 2 * d * e_ch)
    flops = int(n_pad * flops_per_frame + grid[0] * 2 * d * d * m_pad)
    bytes_in = int(sum(x.size * x.dtype.itemsize for x in inputs))
    bytes_out = int((dec_ch + e_ch) * n_pad * 4)

    dec_t, en_t = pl.pallas_call(
        functools.partial(_fastnpss_fused_kernel, use_ext),
        grid=grid,
        in_specs=in_specs,
        out_specs=(tiled(dec_ch), tiled(e_ch)),
        out_shape=(jax.ShapeDtypeStruct((dec_ch, n_pad), f32),
                   jax.ShapeDtypeStruct((e_ch, n_pad), f32)),
        compiler_params=pltpu.CompilerParams(
            dimension_semantics=("parallel",),       # use both v7x TensorCores
            vmem_limit_bytes=32 * 1024 * 1024),      # per-step footprint ~1 MiB
        cost_estimate=pl.CostEstimate(flops=flops, transcendentals=0,
                                      bytes_accessed=bytes_in + bytes_out),
    )(*inputs)

    # Strip lane padding and return the module's (B, T, C) convention.
    decoder_output = dec_t[:, :n].T.reshape(b, t_out, dec_ch)
    energy_predicted = en_t[:, :n].T.reshape(b, t_out, e_ch)
    return decoder_output, energy_predicted


# ------------------------- pure-JAX reference (check) ------------------------
def _q(x):
    """Round to the MXU operand dtype and back (mirrors the kernel's casts)."""
    return x.astype(MXU_DTYPE).astype(jnp.float32)


def _mxu_dot(a, b):
    return jnp.dot(a.astype(MXU_DTYPE), b.astype(MXU_DTYPE),
                   preferred_element_type=jnp.float32)


def _expand_and_pad_ref(encoder_output, phn_count, t_out):
    csum = jnp.cumsum(phn_count, axis=1)
    t_idx = jnp.arange(t_out)
    phn_idx = jnp.sum(t_idx[None, :, None] >= csum[:, None, :], axis=-1)
    phn_idx = jnp.clip(phn_idx, 0, encoder_output.shape[1] - 1)
    valid = t_idx[None, :] < csum[:, -1:]
    gathered = jnp.take_along_axis(encoder_output, phn_idx[..., None], axis=1)
    return jnp.where(valid[..., None], gathered, 0.0)


def reference_forward(params, src_seq, phn_count, dis_pos, f0, for_mask,
                      g_bias, energy=None):
    """Pure-JAX mirror of the fused kernel's math (validation only); matmul
    operands are rounded to MXU_DTYPE exactly like the kernel does."""
    enc_in = params["emb"][src_seq]
    enc = _mxu_dot(enc_in, params["enc_w"]) + params["enc_b"]
    r_output = _expand_and_pad_ref(_q(enc), phn_count, dis_pos.shape[1])

    def dec_block(p, x):
        cond = _q(dis_pos) * _q(p["wp"]) + _q(f0) * _q(p["wf"]) + _q(g_bias)
        h = (x + cond) * for_mask
        h1 = jax.nn.relu(_mxu_dot(h, p["w1"]) + p["b1"])
        return (_mxu_dot(h1, p["w2"]) + p["b2"]) * for_mask

    energy_predicted = dec_block(params["energy_predictor"], r_output)
    e_src = energy if energy is not None else energy_predicted
    e_src = _bin_energy_enc(jax.lax.stop_gradient(e_src))
    e_emb = _mxu_dot(e_src, params["energy_emb_w"]) + params["energy_emb_b"]
    decoder_output = dec_block(params["decoder"], r_output + e_emb)
    return decoder_output, energy_predicted


# ---------------------------------- main -------------------------------------
if __name__ == "__main__":
    key = jax.random.PRNGKey(0)
    kp, k1, k2, k3, k4, k5 = jax.random.split(key, 6)

    params = init_params(kp)
    kparams = prepare_kernel_params(params)

    src_seq = jax.random.randint(k1, (B, T_SRC), 0, VOCAB)          # token ids
    # 1..20 frames per phoneme -> total <= 160 < T_OUT, so padded frames exist
    phn_count = jax.random.randint(k2, (B, T_SRC), 1, 21)
    dis_pos = (jnp.arange(T_OUT, dtype=jnp.float32)[None, :, None] / T_OUT
               ) * jnp.ones((B, 1, 1), jnp.float32)                 # (B,T,1)
    f0 = jax.random.uniform(k3, (B, T_OUT, 1), jnp.float32)
    total = jnp.sum(phn_count, axis=1, keepdims=True)               # (B,1)
    for_mask = (jnp.arange(T_OUT)[None, :, None]
                < total[:, :, None]).astype(jnp.float32)            # (B,T,1)
    g_bias = jax.random.normal(k4, (B, T_OUT, 1), jnp.float32) * 0.1

    dec_out, energy_pred = fast_npss_forward(
        kparams, src_seq, phn_count, dis_pos, f0, for_mask, g_bias, energy=None)
    jax.block_until_ready((dec_out, energy_pred))

    assert dec_out.shape == (B, T_OUT, DECODER_OUT_CHANNELS)
    assert energy_pred.shape == (B, T_OUT, ENERGY_CHANNELS)
    assert bool(jnp.all(jnp.isfinite(dec_out)))
    assert bool(jnp.all(jnp.isfinite(energy_pred)))

    # (1) energy-predictor path vs. the pure-JAX mirror (no quantizer involved)
    ref_dec, ref_energy = reference_forward(
        params, src_seq, phn_count, dis_pos, f0, for_mask, g_bias, None)
    assert bool(jnp.allclose(energy_pred, ref_energy, rtol=1e-2, atol=1e-2))

    # (2) decoder path: feed the kernel's own predicted energy back to the
    #     reference as external energy so both implementations bin the
    #     *identical* values and a bin-edge rounding flip cannot cause a
    #     spurious mismatch.
    ref_dec2, _ = reference_forward(
        params, src_seq, phn_count, dis_pos, f0, for_mask, g_bias,
        energy=energy_pred)
    assert bool(jnp.allclose(dec_out, ref_dec2, rtol=1e-2, atol=1e-2))

    # (3) external-energy path of the kernel
    energy_ext = jax.random.normal(k5, (B, T_OUT, ENERGY_CHANNELS), jnp.float32)
    dec_out3, energy_pred3 = fast_npss_forward(
        kparams, src_seq, phn_count, dis_pos, f0, for_mask, g_bias,
        energy=energy_ext)
    jax.block_until_ready((dec_out3, energy_pred3))
    ref_dec3, ref_energy3 = reference_forward(
        params, src_seq, phn_count, dis_pos, f0, for_mask, g_bias,
        energy=energy_ext)
    assert bool(jnp.allclose(energy_pred3, ref_energy3, rtol=1e-2, atol=1e-2))
    assert bool(jnp.allclose(dec_out3, ref_dec3, rtol=1e-2, atol=1e-2))

    print("KERNEL_OK")
</pallas_src>

<mosaic_0001>
module attributes {stable_mosaic.version = 11 : i64} {
  func.func @_fastnpss_fused_kernel(%arg0: i32, %arg1: memref<8x128xf32, #tpu.memory_space<vmem>>, %arg2: memref<32x16xbf16, #tpu.memory_space<vmem>>, %arg3: memref<32x1xf32, #tpu.memory_space<vmem>>, %arg4: memref<32x32xbf16, #tpu.memory_space<vmem>>, %arg5: memref<96x8xbf16, #tpu.memory_space<vmem>>, %arg6: memref<128x32xbf16, #tpu.memory_space<vmem>>, %arg7: memref<8x64xbf16, #tpu.memory_space<vmem>>, %arg8: memref<24x64xbf16, #tpu.memory_space<vmem>>, %arg9: memref<32x8xbf16, #tpu.memory_space<vmem>>, %arg10: memref<224x1xf32, #tpu.memory_space<vmem>>, %arg11: memref<24x128xf32, #tpu.memory_space<vmem>>, %arg12: memref<8x128xf32, #tpu.memory_space<vmem>>) attributes {dimension_semantics = [#tpu.dimension_semantics<parallel>], iteration_bounds = array<i64: 3>, scalar_prefetch = 0 : i64, scratch_operands = 0 : i64, tpu.core_type = #tpu.core_type<tc>, window_params = [{transform_indices = @transform_0, window_bounds = array<i64: 8, 128>}, {pipeline_mode = #tpu.pipeline_mode<synchronous>, transform_indices = @transform_1, window_bounds = array<i64: 32, 16>}, {pipeline_mode = #tpu.pipeline_mode<synchronous>, transform_indices = @transform_2, window_bounds = array<i64: 32, 1>}, {pipeline_mode = #tpu.pipeline_mode<synchronous>, transform_indices = @transform_3, window_bounds = array<i64: 32, 32>}, {pipeline_mode = #tpu.pipeline_mode<synchronous>, transform_indices = @transform_4, window_bounds = array<i64: 96, 8>}, {pipeline_mode = #tpu.pipeline_mode<synchronous>, transform_indices = @transform_5, window_bounds = array<i64: 128, 32>}, {pipeline_mode = #tpu.pipeline_mode<synchronous>, transform_indices = @transform_6, window_bounds = array<i64: 8, 64>}, {pipeline_mode = #tpu.pipeline_mode<synchronous>, transform_indices = @transform_7, window_bounds = array<i64: 24, 64>}, {pipeline_mode = #tpu.pipeline_mode<synchronous>, transform_indices = @transform_8, window_bounds = array<i64: 32, 8>}, {pipeline_mode = #tpu.pipeline_mode<synchronous>, transform_indices = @transform_9, window_bounds = array<i64: 224, 1>}, {transform_indices = @transform_10, window_bounds = array<i64: 24, 128>}, {transform_indices = @transform_11, window_bounds = array<i64: 8, 128>}]} {
    %c0 = arith.constant 0 : index
    %c0_0 = arith.constant 0 : index
    %0 = vector.load %arg4[%c0, %c0_0] : memref<32x32xbf16, #tpu.memory_space<vmem>>, vector<32x32xbf16>
    %c0_1 = arith.constant 0 : index
    %c0_2 = arith.constant 0 : index
    %1 = vector.load %arg2[%c0_1, %c0_2] : memref<32x16xbf16, #tpu.memory_space<vmem>>, vector<32x16xbf16>
    %cst = arith.constant dense<0.000000e+00> : vector<32x16xf32>
    %2 = tpu.matmul %0, %1, %cst {dimension_numbers = #tpu.dot_dimension_numbers<[1], [0], [0], [1], [0, 0, 1, 1], [], []>} : vector<32x32xbf16>, vector<32x16xbf16>, vector<32x16xf32> -> vector<32x16xf32>
    %c0_3 = arith.constant 0 : index
    %c0_4 = arith.constant 0 : index
    %3 = vector.load %arg10[%c0_3, %c0_4] : memref<224x1xf32, #tpu.memory_space<vmem>>, vector<32x1xf32>
    %4 = vector.broadcast %3 : vector<32x1xf32> to vector<32x16xf32>
    %5 = arith.addf %2, %4 : vector<32x16xf32>
    %6 = arith.truncf %5 : vector<32x16xf32> to vector<32x16xbf16>
    %c128_i32 = arith.constant 128 : i32
    %7 = arith.muli %arg0, %c128_i32 : i32
    %8 = tpu.iota {dimensions = array<i32: 1>} : vector<16x128xi32>
    %9 = vector.broadcast %7 : i32 to vector<16x128xi32>
    %10 = arith.addi %9, %8 : vector<16x128xi32>
    %11 = arith.sitofp %10 : vector<16x128xi32> to vector<16x128xf32>
    %c0_5 = arith.constant 0 : index
    %c0_6 = arith.constant 0 : index
    %12 = vector.load %arg3[%c0_5, %c0_6] : memref<32x1xf32, #tpu.memory_space<vmem>>, vector<16x1xf32>
    %c16 = arith.constant 16 : index
    %c0_7 = arith.constant 0 : index
    %13 = vector.load %arg3[%c16, %c0_7] : memref<32x1xf32, #tpu.memory_space<vmem>>, vector<16x1xf32>
    %14 = vector.broadcast %12 : vector<16x1xf32> to vector<16x128xf32>
    %15 = arith.cmpf oge, %11, %14 : vector<16x128xf32>
    %16 = vector.broadcast %13 : vector<16x1xf32> to vector<16x128xf32>
    %17 = arith.cmpf olt, %11, %16 : vector<16x128xf32>
    %18 = arith.andi %15, %17 : vector<16x128xi1>
    %19 = arith.extui %18 : vector<16x128xi1> to vector<16x128xi32>
    %20 = arith.sitofp %19 : vector<16x128xi32> to vector<16x128xf32>
    %21 = arith.truncf %20 : vector<16x128xf32> to vector<16x128xbf16>
    %cst_8 = arith.constant dense<0.000000e+00> : vector<32x128xf32>
    %22 = tpu.matmul %6, %21, %cst_8 {dimension_numbers = #tpu.dot_dimension_numbers<[1], [0], [0], [1], [0, 0, 1, 1], [], []>} : vector<32x16xbf16>, vector<16x128xbf16>, vector<32x128xf32> -> vector<32x128xf32>
    %c0_9 = arith.constant 0 : index
    %c0_10 = arith.constant 0 : index
    %23 = vector.load %arg5[%c0_9, %c0_10] : memref<96x8xbf16, #tpu.memory_space<vmem>>, vector<96x8xbf16>
    %c0_11 = arith.constant 0 : index
    %c0_12 = arith.constant 0 : index
    %24 = vector.load %arg1[%c0_11, %c0_12] : memref<8x128xf32, #tpu.memory_space<vmem>>, vector<8x128xf32>
    %25 = arith.truncf %24 : vector<8x128xf32> to vector<8x128xbf16>
    %cst_13 = arith.constant dense<0.000000e+00> : vector<96x128xf32>
    %26 = tpu.matmul %23, %25, %cst_13 {dimension_numbers = #tpu.dot_dimension_numbers<[1], [0], [0], [1], [0, 0, 1, 1], [], []>} : vector<96x8xbf16>, vector<8x128xbf16>, vector<96x128xf32> -> vector<96x128xf32>
    %27 = vector.extract_strided_slice %26 {offsets = [0, 0], sizes = [32, 128], strides = [1, 1]} : vector<96x128xf32> to vector<32x128xf32>
    %28 = vector.extract_strided_slice %26 {offsets = [32, 0], sizes = [32, 128], strides = [1, 1]} : vector<96x128xf32> to vector<32x128xf32>
    %29 = vector.extract_strided_slice %26 {offsets = [64, 0], sizes = [32, 128], strides = [1, 1]} : vector<96x128xf32> to vector<32x128xf32>
    %c0_14 = arith.constant 0 : index
    %c0_15 = arith.constant 0 : index
    %30 = vector.load %arg6[%c0_14, %c0_15] : memref<128x32xbf16, #tpu.memory_space<vmem>>, vector<128x32xbf16>
    %31 = vector.extract_strided_slice %30 {offsets = [0, 0], sizes = [64, 32], strides = [1, 1]} : vector<128x32xbf16> to vector<64x32xbf16>
    %c32 = arith.constant 32 : index
    %c0_16 = arith.constant 0 : index
    %32 = vector.load %arg10[%c32, %c0_16] : memref<224x1xf32, #tpu.memory_space<vmem>>, vector<64x1xf32>
    %c0_17 = arith.constant 0 : index
    %c0_18 = arith.constant 0 : index
    %33 = vector.load %arg7[%c0_17, %c0_18] : memref<8x64xbf16, #tpu.memory_space<vmem>>, vector<8x64xbf16>
    %c96 = arith.constant 96 : index
    %c0_19 = arith.constant 0 : index
    %34 = vector.load %arg10[%c96, %c0_19] : memref<224x1xf32, #tpu.memory_space<vmem>>, vector<8x1xf32>
    %35 = arith.addf %22, %28 : vector<32x128xf32>
    %36 = arith.mulf %35, %27 : vector<32x128xf32>
    %37 = arith.truncf %36 : vector<32x128xf32> to vector<32x128xbf16>
    %cst_20 = arith.constant dense<0.000000e+00> : vector<64x128xf32>
    %38 = tpu.matmul %31, %37, %cst_20 {dimension_numbers = #tpu.dot_dimension_numbers<[1], [0], [0], [1], [0, 0, 1, 1], [], []>} : vector<64x32xbf16>, vector<32x128xbf16>, vector<64x128xf32> -> vector<64x128xf32>
    %39 = vector.broadcast %32 : vector<64x1xf32> to vector<64x128xf32>
    %40 = arith.addf %38, %39 : vector<64x128xf32>
    %cst_21 = arith.constant 0.000000e+00 : f32
    %41 = vector.broadcast %cst_21 : f32 to vector<64x128xf32>
    %42 = arith.maximumf %40, %41 : vector<64x128xf32>
    %43 = arith.truncf %42 : vector<64x128xf32> to vector<64x128xbf16>
    %cst_22 = arith.constant dense<0.000000e+00> : vector<8x128xf32>
    %44 = tpu.matmul %33, %43, %cst_22 {dimension_numbers = #tpu.dot_dimension_numbers<[1], [0], [0], [1], [0, 0, 1, 1], [], []>} : vector<8x64xbf16>, vector<64x128xbf16>, vector<8x128xf32> -> vector<8x128xf32>
    %45 = vector.broadcast %34 : vector<8x1xf32> to vector<8x128xf32>
    %46 = arith.addf %44, %45 : vector<8x128xf32>
    %47 = vector.extract_strided_slice %27 {offsets = [0, 0], sizes = [8, 128], strides = [1, 1]} : vector<32x128xf32> to vector<8x128xf32>
    %48 = arith.mulf %46, %47 : vector<8x128xf32>
    %cst_23 = arith.constant -4.000000e+00 : f32
    %cst_24 = arith.constant 3.99999905 : f32
    %49 = vector.broadcast %cst_23 : f32 to vector<8x128xf32>
    %50 = arith.maximumf %49, %48 : vector<8x128xf32>
    %51 = vector.broadcast %cst_24 : f32 to vector<8x128xf32>
    %52 = arith.minimumf %51, %50 : vector<8x128xf32>
    %cst_25 = arith.constant -4.000000e+00 : f32
    %53 = vector.broadcast %cst_25 : f32 to vector<8x128xf32>
    %54 = arith.subf %52, %53 : vector<8x128xf32>
    %cst_26 = arith.constant 3.200000e+01 : f32
    %55 = vector.broadcast %cst_26 : f32 to vector<8x128xf32>
    %56 = arith.mulf %54, %55 : vector<8x128xf32>
    %57 = math.floor %56 : vector<8x128xf32>
    %cst_27 = arith.constant 3.125000e-02 : f32
    %58 = vector.broadcast %cst_27 : f32 to vector<8x128xf32>
    %59 = arith.mulf %57, %58 : vector<8x128xf32>
    %cst_28 = arith.constant -4.000000e+00 : f32
    %60 = vector.broadcast %cst_28 : f32 to vector<8x128xf32>
    %61 = arith.addf %59, %60 : vector<8x128xf32>
    %62 = arith.truncf %61 : vector<8x128xf32> to vector<8x128xbf16>
    %c0_29 = arith.constant 0 : index
    %c0_30 = arith.constant 0 : index
    %63 = vector.load %arg9[%c0_29, %c0_30] : memref<32x8xbf16, #tpu.memory_space<vmem>>, vector<32x8xbf16>
    %cst_31 = arith.constant dense<0.000000e+00> : vector<32x128xf32>
    %64 = tpu.matmul %63, %62, %cst_31 {dimension_numbers = #tpu.dot_dimension_numbers<[1], [0], [0], [1], [0, 0, 1, 1], [], []>} : vector<32x8xbf16>, vector<8x128xbf16>, vector<32x128xf32> -> vector<32x128xf32>
    %c104 = arith.constant 104 : index
    %c0_32 = arith.constant 0 : index
    %65 = vector.load %arg10[%c104, %c0_32] : memref<224x1xf32, #tpu.memory_space<vmem>>, vector<32x1xf32>
    %66 = vector.broadcast %65 : vector<32x1xf32> to vector<32x128xf32>
    %67 = arith.addf %64, %66 : vector<32x128xf32>
    %68 = arith.addf %22, %67 : vector<32x128xf32>
    %69 = vector.extract_strided_slice %30 {offsets = [64, 0], sizes = [64, 32], strides = [1, 1]} : vector<128x32xbf16> to vector<64x32xbf16>
    %c136 = arith.constant 136 : index
    %c0_33 = arith.constant 0 : index
    %70 = vector.load %arg10[%c136, %c0_33] : memref<224x1xf32, #tpu.memory_space<vmem>>, vector<64x1xf32>
    %c0_34 = arith.constant 0 : index
    %c0_35 = arith.constant 0 : index
    %71 = vector.load %arg8[%c0_34, %c0_35] : memref<24x64xbf16, #tpu.memory_space<vmem>>, vector<24x64xbf16>
    %c200 = arith.constant 200 : index
    %c0_36 = arith.constant 0 : index
    %72 = vector.load %arg10[%c200, %c0_36] : memref<224x1xf32, #tpu.memory_space<vmem>>, vector<24x1xf32>
    %73 = arith.addf %68, %29 : vector<32x128xf32>
    %74 = arith.mulf %73, %27 : vector<32x128xf32>
    %75 = arith.truncf %74 : vector<32x128xf32> to vector<32x128xbf16>
    %cst_37 = arith.constant dense<0.000000e+00> : vector<64x128xf32>
    %76 = tpu.matmul %69, %75, %cst_37 {dimension_numbers = #tpu.dot_dimension_numbers<[1], [0], [0], [1], [0, 0, 1, 1], [], []>} : vector<64x32xbf16>, vector<32x128xbf16>, vector<64x128xf32> -> vector<64x128xf32>
    %77 = vector.broadcast %70 : vector<64x1xf32> to vector<64x128xf32>
    %78 = arith.addf %76, %77 : vector<64x128xf32>
    %cst_38 = arith.constant 0.000000e+00 : f32
    %79 = vector.broadcast %cst_38 : f32 to vector<64x128xf32>
    %80 = arith.maximumf %78, %79 : vector<64x128xf32>
    %81 = arith.truncf %80 : vector<64x128xf32> to vector<64x128xbf16>
    %cst_39 = arith.constant dense<0.000000e+00> : vector<24x128xf32>
    %82 = tpu.matmul %71, %81, %cst_39 {dimension_numbers = #tpu.dot_dimension_numbers<[1], [0], [0], [1], [0, 0, 1, 1], [], []>} : vector<24x64xbf16>, vector<64x128xbf16>, vector<24x128xf32> -> vector<24x128xf32>
    %83 = vector.broadcast %72 : vector<24x1xf32> to vector<24x128xf32>
    %84 = arith.addf %82, %83 : vector<24x128xf32>
    %85 = vector.extract_strided_slice %27 {offsets = [0, 0], sizes = [24, 128], strides = [1, 1]} : vector<32x128xf32> to vector<24x128xf32>
    %86 = arith.mulf %84, %85 : vector<24x128xf32>
    %c0_40 = arith.constant 0 : index
    %c0_41 = arith.constant 0 : index
    %87 = vector.load %arg11[%c0_40, %c0_41] : memref<24x128xf32, #tpu.memory_space<vmem>>, vector<24x128xf32>
    tpu.vector_store %arg11[%c0_40, %c0_41], %86 {strides = array<i32>} : memref<24x128xf32, #tpu.memory_space<vmem>>, vector<24x128xf32>,
    %c0_42 = arith.constant 0 : index
    %c0_43 = arith.constant 0 : index
    %88 = vector.load %arg12[%c0_42, %c0_43] : memref<8x128xf32, #tpu.memory_space<vmem>>, vector<8x128xf32>
    tpu.vector_store %arg12[%c0_42, %c0_43], %48 {strides = array<i32>} : memref<8x128xf32, #tpu.memory_space<vmem>>, vector<8x128xf32>,
    return
  }
  func.func @transform_0(%arg0: i32) -> (i32, i32) {
    %c0_i32 = arith.constant 0 : i32
    %c0_i32_0 = arith.constant 0 : i32
    return %c0_i32, %arg0 : i32, i32
  }
  func.func @transform_1(%arg0: i32) -> (i32, i32) {
    %c0_i32 = arith.constant 0 : i32
    %c0_i32_0 = arith.constant 0 : i32
    %c0_i32_1 = arith.constant 0 : i32
    return %c0_i32, %c0_i32_0 : i32, i32
  }
  func.func @transform_2(%arg0: i32) -> (i32, i32) {
    %c0_i32 = arith.constant 0 : i32
    %c0_i32_0 = arith.constant 0 : i32
    %c0_i32_1 = arith.constant 0 : i32
    return %c0_i32, %c0_i32_0 : i32, i32
  }
  func.func @transform_3(%arg0: i32) -> (i32, i32) {
    %c0_i32 = arith.constant 0 : i32
    %c0_i32_0 = arith.constant 0 : i32
    %c0_i32_1 = arith.constant 0 : i32
    return %c0_i32, %c0_i32_0 : i32, i32
  }
  func.func @transform_4(%arg0: i32) -> (i32, i32) {
    %c0_i32 = arith.constant 0 : i32
    %c0_i32_0 = arith.constant 0 : i32
    %c0_i32_1 = arith.constant 0 : i32
    return %c0_i32, %c0_i32_0 : i32, i32
  }
  func.func @transform_5(%arg0: i32) -> (i32, i32) {
    %c0_i32 = arith.constant 0 : i32
    %c0_i32_0 = arith.constant 0 : i32
    %c0_i32_1 = arith.constant 0 : i32
    return %c0_i32, %c0_i32_0 : i32, i32
  }
  func.func @transform_6(%arg0: i32) -> (i32, i32) {
    %c0_i32 = arith.constant 0 : i32
    %c0_i32_0 = arith.constant 0 : i32
    %c0_i32_1 = arith.constant 0 : i32
    return %c0_i32, %c0_i32_0 : i32, i32
  }
  func.func @transform_7(%arg0: i32) -> (i32, i32) {
    %c0_i32 = arith.constant 0 : i32
    %c0_i32_0 = arith.constant 0 : i32
    %c0_i32_1 = arith.constant 0 : i32
    return %c0_i32, %c0_i32_0 : i32, i32
  }
  func.func @transform_8(%arg0: i32) -> (i32, i32) {
    %c0_i32 = arith.constant 0 : i32
    %c0_i32_0 = arith.constant 0 : i32
    %c0_i32_1 = arith.constant 0 : i32
    return %c0_i32, %c0_i32_0 : i32, i32
  }
  func.func @transform_9(%arg0: i32) -> (i32, i32) {
    %c0_i32 = arith.constant 0 : i32
    %c0_i32_0 = arith.constant 0 : i32
    %c0_i32_1 = arith.constant 0 : i32
    return %c0_i32, %c0_i32_0 : i32, i32
  }
  func.func @transform_10(%arg0: i32) -> (i32, i32) {
    %c0_i32 = arith.constant 0 : i32
    %c0_i32_0 = arith.constant 0 : i32
    return %c0_i32, %arg0 : i32, i32
  }
  func.func @transform_11(%arg0: i32) -> (i32, i32) {
    %c0_i32 = arith.constant 0 : i32
    %c0_i32_0 = arith.constant 0 : i32
    return %c0_i32, %arg0 : i32, i32
  }
}

</mosaic_0001>

<llo_original>
// kernel: fast_npss_forward.1
$region0: #{fast_npss_forward.1}
  #allocation0 [shape = 'u32[]', space=smem, size = 0x4, offset = 0x4, fixed_abs, tag = 'smem constant byte address 0x4 - core index']
  #allocation1 [shape = 'u32[144,128]{1,0:T(1,128)}', space=vmem, size = 0x12000, scoped, tag = 'internal scratch']
  %s0 = inlined_call_operand.vmem [shape: f32[8,384], index: 0, kind: input, shape index: {}]
  %s1 = inlined_call_operand.vmem [shape: bf16[32,16], index: 1, kind: input, shape index: {}]
  %s2 = inlined_call_operand.vmem [shape: f32[32,1], index: 2, kind: input, shape index: {}]
  %s3 = inlined_call_operand.vmem [shape: bf16[32,32], index: 3, kind: input, shape index: {}]
  %s4 = inlined_call_operand.vmem [shape: bf16[96,8], index: 4, kind: input, shape index: {}]
  %s5 = inlined_call_operand.vmem [shape: bf16[128,32], index: 5, kind: input, shape index: {}]
  %s6 = inlined_call_operand.vmem [shape: bf16[8,64], index: 6, kind: input, shape index: {}]
  %s7 = inlined_call_operand.vmem [shape: bf16[24,64], index: 7, kind: input, shape index: {}]
  %s8 = inlined_call_operand.vmem [shape: bf16[32,8], index: 8, kind: input, shape index: {}]
  %s9 = inlined_call_operand.vmem [shape: f32[224,1], index: 9, kind: input, shape index: {}]
  %s10 = inlined_call_operand.vmem [shape: f32[24,384], index: 10, kind: output, shape index: {0}]
  %s11 = inlined_call_operand.vmem [shape: f32[8,384], index: 11, kind: output, shape index: {1}]
  %12 = xla_tuple %s10, %s11
  %s13 = sld [smem:[#allocation0]]
  $region115: #{fast_npss_forward.1} parent=0
    _
  %s15 = ssub.s32 1, %s13
  %s16 = scalar_select 0, %s15, %s13
  $region1: #{fast_npss_forward.1} parent=0
    #allocation2 [shape = 'u8[24576]{0}', space=vmem, size = 0x6000, scoped, tag = 'output window, operand 0']
    loop: start=0, step=1, limit=5
    $region2: #{fast_npss_forward.1} parent=1 // loop_pre_header
      _
    $region3: #{fast_npss_forward.1} parent=1 // loop_header
      %s18 = sphi 0, %s22
      %p19 = scmp.ge.s32.totalorder %s18, 5
      %s28 = sphi 0, %s30
      %s31 = sphi 0, %s28
      %s32 = sphi 0, %s31
      %s48 = sphi 0, %s32
      %s52 = sphi 0, %s52
      %s54 = sphi 0, %s52
      %s55 = sphi 0, %s54
      %s69 = sphi 0, %s55
      %s73 = sphi 0, %s73
      %s75 = sphi 0, %s73
      %s76 = sphi 0, %s75
      %s90 = sphi 0, %s76
      %s94 = sphi 0, %s94
      %s96 = sphi 0, %s94
      %s97 = sphi 0, %s96
      %s111 = sphi 0, %s97
      %s115 = sphi 0, %s115
      %s117 = sphi 0, %s115
      %s118 = sphi 0, %s117
      %s132 = sphi 0, %s118
      %s136 = sphi 0, %s136
      %s138 = sphi 0, %s136
      %s139 = sphi 0, %s138
      %s153 = sphi 0, %s139
      %s157 = sphi 0, %s157
      %s159 = sphi 0, %s157
      %s160 = sphi 0, %s159
      %s174 = sphi 0, %s160
      %s178 = sphi 0, %s178
      %s180 = sphi 0, %s178
      %s181 = sphi 0, %s180
      %s195 = sphi 0, %s181
      %s199 = sphi 0, %s199
      %s201 = sphi 0, %s199
      %s202 = sphi 0, %s201
      %s216 = sphi 0, %s202
      %s220 = sphi 0, %s220
      %s222 = sphi 0, %s220
      %s223 = sphi 0, %s222
      %s237 = sphi 0, %s223
      %s243 = sphi 0, %s245
      %s246 = sphi 0, %s243
      %s247 = sphi 0, %s246
      %s263 = sphi 0, %s247
      %s269 = sphi 0, %s271
      %s272 = sphi 0, %s269
      %s273 = sphi 0, %s272
      %s289 = sphi 0, %s273
    $region4: #{fast_npss_forward.1} parent=1 // loop_header_branch
      %21 = sbr.rel (%p19) target = $region8
    $region5: #{fast_npss_forward.1} parent=1 // loop_body
      %s23 = ssub.s32 %s18, 1
      %s24 = ssub.s32 %s18, 2
      %s25 = sadd.s32 %s18, 1
      %s26 = ssub.s32 %s18, %s25
      %p27 = scmp.eq.s32.totalorder %s26, 0
      %s29 = sadd.s32 %s28, 1
      %s30 = scalar_select %p27, %s28, %s29
      %p33 = pneg %p27
      %p34 = scmp.eq.s32.totalorder %s18, 2
      %p35 = por %p33, %p34
      %p36 = scmp.ne.s32.totalorder %s28, %s31
      %p37 = scmp.eq.s32.totalorder %s18, 0
      %p38 = por %p36, %p37
      %p39 = scmp.ne.s32.totalorder %s28, %s31
      %p40 = scmp.eq.s32.totalorder %s23, 2
      %p41 = por %p39, %p40
      %p42 = scmp.ne.s32.totalorder %s31, %s32
      %p43 = scmp.eq.s32.totalorder %s23, 0
      %p44 = por %p42, %p43
      %p45 = scmp.ne.s32.totalorder %s31, %s32
      %p46 = scmp.eq.s32.totalorder %s24, 2
      %p47 = por %p45, %p46
      %p49 = scmp.ne.s32.totalorder %s32, %s48
      %p50 = scmp.eq.s32.totalorder %s24, 0
      %p51 = por %p49, %p50
      %s53 = sadd.s32 %s52, 1
      %p56 = scmp.eq.s32.totalorder %s18, 2
      %p57 = scmp.ne.s32.totalorder %s52, %s54
      %p58 = scmp.eq.s32.totalorder %s18, 0
      %p59 = por %p57, %p58
      %p60 = scmp.ne.s32.totalorder %s52, %s54
      %p61 = scmp.eq.s32.totalorder %s23, 2
      %p62 = por %p60, %p61
      %p63 = scmp.ne.s32.totalorder %s54, %s55
      %p64 = scmp.eq.s32.totalorder %s23, 0
      %p65 = por %p63, %p64
      %p66 = scmp.ne.s32.totalorder %s54, %s55
      %p67 = scmp.eq.s32.totalorder %s24, 2
      %p68 = por %p66, %p67
      %p70 = scmp.ne.s32.totalorder %s55, %s69
      %p71 = scmp.eq.s32.totalorder %s24, 0
      %p72 = por %p70, %p71
      %s74 = sadd.s32 %s73, 1
      %p77 = scmp.eq.s32.totalorder %s18, 2
      %p78 = scmp.ne.s32.totalorder %s73, %s75
      %p79 = scmp.eq.s32.totalorder %s18, 0
      %p80 = por %p78, %p79
      %p81 = scmp.ne.s32.totalorder %s73, %s75
      %p82 = scmp.eq.s32.totalorder %s23, 2
      %p83 = por %p81, %p82
      %p84 = scmp.ne.s32.totalorder %s75, %s76
      %p85 = scmp.eq.s32.totalorder %s23, 0
      %p86 = por %p84, %p85
      %p87 = scmp.ne.s32.totalorder %s75, %s76
      %p88 = scmp.eq.s32.totalorder %s24, 2
      %p89 = por %p87, %p88
      %p91 = scmp.ne.s32.totalorder %s76, %s90
      %p92 = scmp.eq.s32.totalorder %s24, 0
      %p93 = por %p91, %p92
      %s95 = sadd.s32 %s94, 1
      %p98 = scmp.eq.s32.totalorder %s18, 2
      %p99 = scmp.ne.s32.totalorder %s94, %s96
      %p100 = scmp.eq.s32.totalorder %s18, 0
      %p101 = por %p99, %p100
      %p102 = scmp.ne.s32.totalorder %s94, %s96
      %p103 = scmp.eq.s32.totalorder %s23, 2
      %p104 = por %p102, %p103
      %p105 = scmp.ne.s32.totalorder %s96, %s97
      %p106 = scmp.eq.s32.totalorder %s23, 0
      %p107 = por %p105, %p106
      %p108 = scmp.ne.s32.totalorder %s96, %s97
      %p109 = scmp.eq.s32.totalorder %s24, 2
      %p110 = por %p108, %p109
      %p112 = scmp.ne.s32.totalorder %s97, %s111
      %p113 = scmp.eq.s32.totalorder %s24, 0
      %p114 = por %p112, %p113
      %s116 = sadd.s32 %s115, 1
      %p119 = scmp.eq.s32.totalorder %s18, 2
      %p120 = scmp.ne.s32.totalorder %s115, %s117
      %p121 = scmp.eq.s32.totalorder %s18, 0
      %p122 = por %p120, %p121
      %p123 = scmp.ne.s32.totalorder %s115, %s117
      %p124 = scmp.eq.s32.totalorder %s23, 2
      %p125 = por %p123, %p124
      %p126 = scmp.ne.s32.totalorder %s117, %s118
      %p127 = scmp.eq.s32.totalorder %s23, 0
      %p128 = por %p126, %p127
      %p129 = scmp.ne.s32.totalorder %s117, %s118
      %p130 = scmp.eq.s32.totalorder %s24, 2
      %p131 = por %p129, %p130
      %p133 = scmp.ne.s32.totalorder %s118, %s132
      %p134 = scmp.eq.s32.totalorder %s24, 0
      %p135 = por %p133, %p134
      %s137 = sadd.s32 %s136, 1
      %p140 = scmp.eq.s32.totalorder %s18, 2
      %p141 = scmp.ne.s32.totalorder %s136, %s138
      %p142 = scmp.eq.s32.totalorder %s18, 0
      %p143 = por %p141, %p142
      %p144 = scmp.ne.s32.totalorder %s136, %s138
      %p145 = scmp.eq.s32.totalorder %s23, 2
      %p146 = por %p144, %p145
      %p147 = scmp.ne.s32.totalorder %s138, %s139
      %p148 = scmp.eq.s32.totalorder %s23, 0
      %p149 = por %p147, %p148
      %p150 = scmp.ne.s32.totalorder %s138, %s139
      %p151 = scmp.eq.s32.totalorder %s24, 2
      %p152 = por %p150, %p151
      %p154 = scmp.ne.s32.totalorder %s139, %s153
      %p155 = scmp.eq.s32.totalorder %s24, 0
      %p156 = por %p154, %p155
      %s158 = sadd.s32 %s157, 1
      %p161 = scmp.eq.s32.totalorder %s18, 2
      %p162 = scmp.ne.s32.totalorder %s157, %s159
      %p163 = scmp.eq.s32.totalorder %s18, 0
      %p164 = por %p162, %p163
      %p165 = scmp.ne.s32.totalorder %s157, %s159
      %p166 = scmp.eq.s32.totalorder %s23, 2
      %p167 = por %p165, %p166
      %p168 = scmp.ne.s32.totalorder %s159, %s160
      %p169 = scmp.eq.s32.totalorder %s23, 0
      %p170 = por %p168, %p169
      %p171 = scmp.ne.s32.totalorder %s159, %s160
      %p172 = scmp.eq.s32.totalorder %s24, 2
      %p173 = por %p171, %p172
      %p175 = scmp.ne.s32.totalorder %s160, %s174
      %p176 = scmp.eq.s32.totalorder %s24, 0
      %p177 = por %p175, %p176
      %s179 = sadd.s32 %s178, 1
      %p182 = scmp.eq.s32.totalorder %s18, 2
      %p183 = scmp.ne.s32.totalorder %s178, %s180
      %p184 = scmp.eq.s32.totalorder %s18, 0
      %p185 = por %p183, %p184
      %p186 = scmp.ne.s32.totalorder %s178, %s180
      %p187 = scmp.eq.s32.totalorder %s23, 2
      %p188 = por %p186, %p187
      %p189 = scmp.ne.s32.totalorder %s180, %s181
      %p190 = scmp.eq.s32.totalorder %s23, 0
      %p191 = por %p189, %p190
      %p192 = scmp.ne.s32.totalorder %s180, %s181
      %p193 = scmp.eq.s32.totalorder %s24, 2
      %p194 = por %p192, %p193
      %p196 = scmp.ne.s32.totalorder %s181, %s195
      %p197 = scmp.eq.s32.totalorder %s24, 0
      %p198 = por %p196, %p197
      %s200 = sadd.s32 %s199, 1
      %p203 = scmp.eq.s32.totalorder %s18, 2
      %p204 = scmp.ne.s32.totalorder %s199, %s201
      %p205 = scmp.eq.s32.totalorder %s18, 0
      %p206 = por %p204, %p205
      %p207 = scmp.ne.s32.totalorder %s199, %s201
      %p208 = scmp.eq.s32.totalorder %s23, 2
      %p209 = por %p207, %p208
      %p210 = scmp.ne.s32.totalorder %s201, %s202
      %p211 = scmp.eq.s32.totalorder %s23, 0
      %p212 = por %p210, %p211
      %p213 = scmp.ne.s32.totalorder %s201, %s202
      %p214 = scmp.eq.s32.totalorder %s24, 2
      %p215 = por %p213, %p214
      %p217 = scmp.ne.s32.totalorder %s202, %s216
      %p218 = scmp.eq.s32.totalorder %s24, 0
      %p219 = por %p217, %p218
      %s221 = sadd.s32 %s220, 1
      %p224 = scmp.eq.s32.totalorder %s18, 2
      %p225 = scmp.ne.s32.totalorder %s220, %s222
      %p226 = scmp.eq.s32.totalorder %s18, 0
      %p227 = por %p225, %p226
      %p228 = scmp.ne.s32.totalorder %s220, %s222
      %p229 = scmp.eq.s32.totalorder %s23, 2
      %p230 = por %p228, %p229
      %p231 = scmp.ne.s32.totalorder %s222, %s223
      %p232 = scmp.eq.s32.totalorder %s23, 0
      %p233 = por %p231, %p232
      %p234 = scmp.ne.s32.totalorder %s222, %s223
      %p235 = scmp.eq.s32.totalorder %s24, 2
      %p236 = por %p234, %p235
      %p238 = scmp.ne.s32.totalorder %s223, %s237
      %p239 = scmp.eq.s32.totalorder %s24, 0
      %p240 = por %p238, %p239
      %s241 = ssub.s32 %s18, %s25
      %p242 = scmp.eq.s32.totalorder %s241, 0
      %s244 = sadd.s32 %s243, 1
      %s245 = scalar_select %p242, %s243, %s244
      %p248 = pneg %p242
      %p249 = scmp.eq.s32.totalorder %s18, 2
      %p250 = por %p248, %p249
      %p251 = scmp.ne.s32.totalorder %s243, %s246
      %p252 = scmp.eq.s32.totalorder %s18, 0
      %p253 = por %p251, %p252
      %p254 = scmp.ne.s32.totalorder %s243, %s246
      %p255 = scmp.eq.s32.totalorder %s23, 2
      %p256 = por %p254, %p255
      %p257 = scmp.ne.s32.totalorder %s246, %s247
      %p258 = scmp.eq.s32.totalorder %s23, 0
      %p259 = por %p257, %p258
      %p260 = scmp.ne.s32.totalorder %s246, %s247
      %p261 = scmp.eq.s32.totalorder %s24, 2
      %p262 = por %p260, %p261
      %p264 = scmp.ne.s32.totalorder %s247, %s263
      %p265 = scmp.eq.s32.totalorder %s24, 0
      %p266 = por %p264, %p265
      %s267 = ssub.s32 %s18, %s25
      %p268 = scmp.eq.s32.totalorder %s267, 0
      %s270 = sadd.s32 %s269, 1
      %s271 = scalar_select %p268, %s269, %s270
      %p274 = pneg %p268
      %p275 = scmp.eq.s32.totalorder %s18, 2
      %p276 = por %p274, %p275
      %p277 = scmp.ne.s32.totalorder %s269, %s272
      %p278 = scmp.eq.s32.totalorder %s18, 0
      %p279 = por %p277, %p278
      %p280 = scmp.ne.s32.totalorder %s269, %s272
      %p281 = scmp.eq.s32.totalorder %s23, 2
      %p282 = por %p280, %p281
      %p283 = scmp.ne.s32.totalorder %s272, %s273
      %p284 = scmp.eq.s32.totalorder %s23, 0
      %p285 = por %p283, %p284
      %p286 = scmp.ne.s32.totalorder %s272, %s273
      %p287 = scmp.eq.s32.totalorder %s24, 2
      %p288 = por %p286, %p287
      %p290 = scmp.ne.s32.totalorder %s273, %s289
      %p291 = scmp.eq.s32.totalorder %s24, 0
      %p292 = por %p290, %p291
      %p293 = scmp.le.s32.totalorder 1, %s18
      %p294 = scmp.lt.s32.totalorder %s18, 4
      %p295 = pnand %p293, %p294
      %p296 = pneg %p295
      // Predicated region
      $region9: #{fast_npss_forward.1} parent=5 // pred_check
        _
      $region10: #{fast_npss_forward.1} parent=5 // pred_check_branch
        %298 = sbr.rel (%p295) target = $region12
      $region11: #{fast_npss_forward.1} parent=5 // pred_region
        %s299 = ssub.s32 %s18, 1
        // Predicated region
        $region13: #{fast_npss_forward.1} parent=11 // pred_check
          %p300 = pneg %p65
        $region14: #{fast_npss_forward.1} parent=11 // pred_check_branch
          %302 = sbr.rel (%p300) target = $region16
        $region15: #{fast_npss_forward.1} parent=11 // pred_region
          _
        $region16: #{fast_npss_forward.1} parent=11 // pred_fallthru
          _
        // Predicated region
        $region17: #{fast_npss_forward.1} parent=11 // pred_check
          %p303 = pneg %p86
        $region18: #{fast_npss_forward.1} parent=11 // pred_check_branch
          %305 = sbr.rel (%p303) target = $region20
        $region19: #{fast_npss_forward.1} parent=11 // pred_region
          _
        $region20: #{fast_npss_forward.1} parent=11 // pred_fallthru
          _
        // Predicated region
        $region21: #{fast_npss_forward.1} parent=11 // pred_check
          %p306 = pneg %p107
        $region22: #{fast_npss_forward.1} parent=11 // pred_check_branch
          %308 = sbr.rel (%p306) target = $region24
        $region23: #{fast_npss_forward.1} parent=11 // pred_region
          _
        $region24: #{fast_npss_forward.1} parent=11 // pred_fallthru
          _
        // Predicated region
        $region25: #{fast_npss_forward.1} parent=11 // pred_check
          %p309 = pneg %p128
        $region26: #{fast_npss_forward.1} parent=11 // pred_check_branch
          %311 = sbr.rel (%p309) target = $region28
        $region27: #{fast_npss_forward.1} parent=11 // pred_region
          _
        $region28: #{fast_npss_forward.1} parent=11 // pred_fallthru
          _
        // Predicated region
        $region29: #{fast_npss_forward.1} parent=11 // pred_check
          %p312 = pneg %p149
        $region30: #{fast_npss_forward.1} parent=11 // pred_check_branch
          %314 = sbr.rel (%p312) target = $region32
        $region31: #{fast_npss_forward.1} parent=11 // pred_region
          _
        $region32: #{fast_npss_forward.1} parent=11 // pred_fallthru
          _
        // Predicated region
        $region33: #{fast_npss_forward.1} parent=11 // pred_check
          %p315 = pneg %p170
        $region34: #{fast_npss_forward.1} parent=11 // pred_check_branch
          %317 = sbr.rel (%p315) target = $region36
        $region35: #{fast_npss_forward.1} parent=11 // pred_region
          _
        $region36: #{fast_npss_forward.1} parent=11 // pred_fallthru
          _
        // Predicated region
        $region37: #{fast_npss_forward.1} parent=11 // pred_check
          %p318 = pneg %p191
        $region38: #{fast_npss_forward.1} parent=11 // pred_check_branch
          %320 = sbr.rel (%p318) target = $region40
        $region39: #{fast_npss_forward.1} parent=11 // pred_region
          _
        $region40: #{fast_npss_forward.1} parent=11 // pred_fallthru
          _
        // Predicated region
        $region41: #{fast_npss_forward.1} parent=11 // pred_check
          %p321 = pneg %p212
        $region42: #{fast_npss_forward.1} parent=11 // pred_check_branch
          %323 = sbr.rel (%p321) target = $region44
        $region43: #{fast_npss_forward.1} parent=11 // pred_region
          _
        $region44: #{fast_npss_forward.1} parent=11 // pred_fallthru
          _
        // Predicated region
        $region45: #{fast_npss_forward.1} parent=11 // pred_check
          %p324 = pneg %p233
        $region46: #{fast_npss_forward.1} parent=11 // pred_check_branch
          %326 = sbr.rel (%p324) target = $region48
        $region47: #{fast_npss_forward.1} parent=11 // pred_region
          _
        $region48: #{fast_npss_forward.1} parent=11 // pred_fallthru
          _
      $region12: #{fast_npss_forward.1} parent=5 // pred_fallthru
        _
      %p327 = scmp.lt.s32.totalorder %s18, 3
      // Predicated region
      $region49: #{fast_npss_forward.1} parent=5 // pred_check
        %p328 = pneg %p327
      $region50: #{fast_npss_forward.1} parent=5 // pred_check_branch
        %330 = sbr.rel (%p328) target = $region52
      $region51: #{fast_npss_forward.1} parent=5 // pred_region
        // Predicated region
        $region53: #{fast_npss_forward.1} parent=51 // pred_check
          %p331 = pneg %p38
        $region54: #{fast_npss_forward.1} parent=51 // pred_check_branch
          %333 = sbr.rel (%p331) target = $region56
        $region55: #{fast_npss_forward.1} parent=51 // pred_region
          %p334 = scmp.lt.s32.totalorder %s18, 2
          %s335 = scalar_select %p334, %s18, 2
          %s336 = smul.addr %s335, 8
          %s337 = scalar_lea.vmem %s0, %s336
        $region56: #{fast_npss_forward.1} parent=51 // pred_fallthru
          _
      $region52: #{fast_npss_forward.1} parent=5 // pred_fallthru
        _
      %p338 = scmp.le.s32.totalorder 1, %s18
      %p339 = scmp.lt.s32.totalorder %s18, 4
      %p340 = pnand %p338, %p339
      %p341 = pneg %p340
      // Predicated region
      $region57: #{fast_npss_forward.1} parent=5 // pred_check
        _
      $region58: #{fast_npss_forward.1} parent=5 // pred_check_branch
        %343 = sbr.rel (%p340) target = $region60
      $region59: #{fast_npss_forward.1} parent=5 // pred_region
        %s344 = ssub.s32 %s18, 1
        %p345 = scmp.lt.s32.totalorder %s23, 2
        %s346 = scalar_select %p345, %s23, 2
        %s347 = smul.addr %s346, 8
        %s348 = scalar_lea.vmem %s0, %s347
        %p349 = pneg %p44
        %p350 = pneg %p41
        %p351 = pneg %p65
        %p352 = pneg %p62
        %p353 = pneg %p86
        %p354 = pneg %p83
        %p355 = pneg %p107
        %p356 = pneg %p104
        %p357 = pneg %p128
        %p358 = pneg %p125
        %p359 = pneg %p149
        %p360 = pneg %p146
        %p361 = pneg %p170
        %p362 = pneg %p167
        %p363 = pneg %p191
        %p364 = pneg %p188
        %p365 = pneg %p212
        %p366 = pneg %p209
        %p367 = pneg %p233
        %p368 = pneg %p230
        %p369 = pneg %p259
        %p370 = pneg %p256
        %s371 = sand.u32 %s246, 1
        %s372 = sand.u32 %s246, 1
        %s373 = smul.addr %s372, 24
        %s374 = scalar_lea.vmem [#allocation2], %s373
        %p375 = pneg %p285
        %p376 = pneg %p282
        %p377 = scmp.lt.s32.totalorder %s23, 2
        %s378 = scalar_select %p377, %s23, 2
        %s379 = smul.addr %s378, 8
        %s380 = scalar_lea.vmem %s11, %s379
        %p381 = scmp.lt.s32.totalorder %s23, 2
        %s382 = scalar_select %p381, %s23, 2
        %s383 = smul.addr %s382, 8
        %s384 = scalar_lea.vmem %s0, %s383
        %p385 = scmp.lt.s32.totalorder %s23, 2
        %s386 = scalar_select %p385, %s23, 2
        %s387 = smul.addr %s386, 8
        %s388 = scalar_lea.vmem %s11, %s387
        %v390 = vld [vmem:[%s3] sm:$0xf]
        %v391 = vld [vmem:[%s3 + $0x4] sm:$0xf]
        %v392 = vld [vmem:[%s3 + $0x8] sm:$0xf]
        %v393 = vld [vmem:[%s3 + $0xc] sm:$0xf]
        %v394 = vld [vmem:[%s1] sm:$0xf]
        %v395 = vld [vmem:[%s1 + $0x4] sm:$0xf]
        %v396 = vld [vmem:[%s1 + $0x8] sm:$0xf]
        %v397 = vld [vmem:[%s1 + $0xc] sm:$0xf]
        %v398 = vld [vmem:[%s9] sm:$0xff]
        %v399 = vld [vmem:[%s9 + $0x8] sm:$0xff]
        %v400 = vld [vmem:[%s9 + $0x10] sm:$0xff]
        %v401 = vld [vmem:[%s9 + $0x18] sm:$0xff]
        %403 = vset.pattern.permute.xlu0 0
        %404 = vperm.xlu0 %403, %v398
        %v405 = vpop.permute.xlu0 %404
        %408 = vset.pattern.permute.xlu0 0
        %409 = vperm.xlu0 %408, %v399
        %v410 = vpop.permute.xlu0 %409
        %413 = vset.pattern.permute.xlu0 0
        %414 = vperm.xlu0 %413, %v400
        %v415 = vpop.permute.xlu0 %414
        %418 = vset.pattern.permute.xlu0 0
        %419 = vperm.xlu0 %418, %v401
        %v420 = vpop.permute.xlu0 %419
        %v426 = vunpack.c.l.b16 %v390
        %v427 = vunpack.c.l.b16 %v391
        %v428 = vunpack.c.l.b16 %v392
        %v429 = vunpack.c.l.b16 %v393
        %v430 = vpack.c.b16 %v427, %v426
        %v431 = vpack.c.b16 %v429, %v428
        %v436 = vunpack.c.l.b16 %v394
        %v437 = vunpack.c.l.b16 %v395
        %v438 = vunpack.c.l.b16 %v396
        %v439 = vunpack.c.l.b16 %v397
        %v440 = vpack.c.b16 %v437, %v436
        %v441 = vpack.c.b16 %v439, %v438
        %vm444 = vcmask 261120
        %v446 = vsel %vm444, %v430, 0
        %v449 = vsel %vm444, %v431, 0
        %451 = vmatprep.subr.bf16.mxu0 0
        %452 = vmatpush1.bf16.msra.mxu0 %v440
        %453 = vmatprep.subr.bf16.mxu0 0
        %454 = vmatpush1.bf16.msra.mxu0 %v441
        %455 = vmatprep.subr.bf16.mxu0 0
        %456 = vmatpush1.bf16.msra.mxu0 0
        %457 = vmatprep.subr.bf16.mxu0 0
        %458 = vmatpush1.bf16.msra.mxu0 0
        %459 = vmatprep.subr.bf16.mxu0 0
        %460 = vmatpush1.bf16.msra.mxu0 0
        %461 = vmatprep.subr.bf16.mxu0 0
        %462 = vmatpush1.bf16.msra.mxu0 0
        %463 = vmatprep.subr.bf16.mxu0 0
        %464 = vmatpush1.bf16.msra.mxu0 0
        %465 = vmatprep.subr.bf16.mxu0 0
        %466 = vmatpush1.bf16.msra.mxu0 0
        %467 = vmatprep.subr.bf16.mxu0 0
        %468 = vmatpush1.bf16.msra.mxu0 0
        %469 = vmatprep.subr.bf16.mxu0 0
        %470 = vmatpush1.bf16.msra.mxu0 0
        %471 = vmatprep.subr.bf16.mxu0 0
        %472 = vmatpush1.bf16.msra.mxu0 0
        %473 = vmatprep.subr.bf16.mxu0 0
        %474 = vmatpush1.bf16.msra.mxu0 0
        %475 = vmatprep.subr.bf16.mxu0 0
        %476 = vmatpush1.bf16.msra.mxu0 0
        %477 = vmatprep.subr.bf16.mxu0 0
        %478 = vmatpush1.bf16.msra.mxu0 0
        %479 = vmatprep.subr.bf16.mxu0 0
        %480 = vmatpush1.bf16.msra.mxu0 0
        %481 = vmatprep.subr.bf16.mxu0 0
        %482 = vmatpush1.bf16.msra.mxu0 0
        %483 = vmatprep.mubr.bf16.mxu0 0
        %484 = vmatmul.mubr.bf16.gmra.mrb[0].mxu0 %v446
        %v485 = vpop.f32.mrb[0].mxu0
        %v486 = vadd.f32 %v405, %v485
        %v487 = vpop.f32.mrb[0].mxu0
        %v488 = vpop.f32.mrb[0].mxu0
        %v489 = vadd.f32 %v410, %v488
        %v490 = vpop.f32.mrb[0].mxu0
        %491 = vmatprep.mubr.bf16.mxu0 0
        %492 = vmatmul.mubr.bf16.gmra.mrb[0].mxu0 %v449
        %v493 = vpop.f32.mrb[0].mxu0
        %v494 = vadd.f32 %v415, %v493
        %v495 = vpop.f32.mrb[0].mxu0
        %v496 = vpop.f32.mrb[0].mxu0
        %v497 = vadd.f32 %v420, %v496
        %v498 = vpop.f32.mrb[0].mxu0
        %499 = vdwg.mxu0
        %v500 = vpack.c.bf16 %v489, %v486
        %v501 = vpack.c.bf16 %v497, %v494
        %s502 = smul.u32 %s23, 128
        %v503 = vlaneseq
        %v504 = vand.u32 %v503, 127
        %v505 = vstv %s502
        %v506 = vadd.s32 %v505, %v504
        %v507 = vcvt.s32.f32 %v506
        %v508 = vld [vmem:[%s2] sm:$0xff]
        %v509 = vld [vmem:[%s2 + $0x8] sm:$0xff]
        %v510 = vld [vmem:[%s2 + $0x10] sm:$0xff]
        %v511 = vld [vmem:[%s2 + $0x18] sm:$0xff]
        %513 = vset.pattern.permute.xlu0 0
        %514 = vperm.xlu0 %513, %v508
        %v515 = vpop.permute.xlu0 %514
        %518 = vset.pattern.permute.xlu0 0
        %519 = vperm.xlu0 %518, %v509
        %v520 = vpop.permute.xlu0 %519
        %vm522 = vcmp.ge.f32.partialorder %v507, %v515
        %vm523 = vcmp.ge.f32.partialorder %v507, %v520
        %525 = vset.pattern.permute.xlu0 0
        %526 = vperm.xlu0 %525, %v510
        %v527 = vpop.permute.xlu0 %526
        %530 = vset.pattern.permute.xlu0 0
        %531 = vperm.xlu0 %530, %v511
        %v532 = vpop.permute.xlu0 %531
        %vm534 = vcmp.lt.f32.partialorder %v507, %v527
        %vm535 = vcmp.lt.f32.partialorder %v507, %v532
        %vm536 = vmand %vm522, %vm534
        %vm537 = vmand %vm523, %vm535
        %v538 = vsel %vm536, 1, 0
        %v539 = vsel %vm537, 1, 0
        %v540 = vcvt.s32.f32 %v538
        %v541 = vcvt.s32.f32 %v539
        %v542 = vpack.c.bf16 %v541, %v540
        %vm543 = vcmask 130048
        %v545 = vsel %vm543, %v500, 0
        %v548 = vsel %vm543, %v501, 0
        %550 = vmatprep.subr.bf16.mxu0 0
        %551 = vmatpush1.bf16.msra.mxu0 %v542
        %552 = vmatprep.subr.bf16.mxu0 0
        %553 = vmatpush1.bf16.msra.mxu0 0
        %554 = vmatprep.subr.bf16.mxu0 0
        %555 = vmatpush1.bf16.msra.mxu0 0
        %556 = vmatprep.subr.bf16.mxu0 0
        %557 = vmatpush1.bf16.msra.mxu0 0
        %558 = vmatprep.subr.bf16.mxu0 0
        %559 = vmatpush1.bf16.msra.mxu0 0
        %560 = vmatprep.subr.bf16.mxu0 0
        %561 = vmatpush1.bf16.msra.mxu0 0
        %562 = vmatprep.subr.bf16.mxu0 0
        %563 = vmatpush1.bf16.msra.mxu0 0
        %564 = vmatprep.subr.bf16.mxu0 0
        %565 = vmatpush1.bf16.msra.mxu0 0
        %566 = vmatprep.subr.bf16.mxu0 0
        %567 = vmatpush1.bf16.msra.mxu0 0
        %568 = vmatprep.subr.bf16.mxu0 0
        %569 = vmatpush1.bf16.msra.mxu0 0
        %570 = vmatprep.subr.bf16.mxu0 0
        %571 = vmatpush1.bf16.msra.mxu0 0
        %572 = vmatprep.subr.bf16.mxu0 0
        %573 = vmatpush1.bf16.msra.mxu0 0
        %574 = vmatprep.subr.bf16.mxu0 0
        %575 = vmatpush1.bf16.msra.mxu0 0
        %576 = vmatprep.subr.bf16.mxu0 0
        %577 = vmatpush1.bf16.msra.mxu0 0
        %578 = vmatprep.subr.bf16.mxu0 0
        %579 = vmatpush1.bf16.msra.mxu0 0
        %580 = vmatprep.subr.bf16.mxu0 0
        %581 = vmatpush1.bf16.msra.mxu0 0
        %582 = vmatprep.mubr.bf16.mxu0 0
        %583 = vmatmul.mubr.bf16.gmra.mrb[0].mxu0 %v545
        %v584 = vpop.f32.mrb[0].mxu0
        %v585 = vadd.f32 0.0, %v584
        %v586 = vpop.f32.mrb[0].mxu0
        %v587 = vpop.f32.mrb[0].mxu0
        %v588 = vadd.f32 0.0, %v587
        %v589 = vpop.f32.mrb[0].mxu0
        %590 = vmatprep.mubr.bf16.mxu0 0
        %591 = vmatmul.mubr.bf16.gmra.mrb[0].mxu0 %v548
        %v592 = vpop.f32.mrb[0].mxu0
        %v593 = vadd.f32 0.0, %v592
        %v594 = vpop.f32.mrb[0].mxu0
        %v595 = vpop.f32.mrb[0].mxu0
        %v596 = vadd.f32 0.0, %v595
        %v597 = vpop.f32.mrb[0].mxu0
        %598 = vdwg.mxu0
        %v599 = vld [vmem:[%s4] sm:$0xf]
        %v600 = vld [vmem:[%s4 + $0x4] sm:$0xf]
        %v601 = vld [vmem:[%s4 + $0x8] sm:$0xf]
        %v602 = vld [vmem:[%s4 + $0xc] sm:$0xf]
        %v603 = vld [vmem:[%s4 + $0x10] sm:$0xf]
        %v604 = vld [vmem:[%s4 + $0x14] sm:$0xf]
        %v605 = vld [vmem:[%s4 + $0x18] sm:$0xf]
        %v606 = vld [vmem:[%s4 + $0x1c] sm:$0xf]
        %v607 = vld [vmem:[%s4 + $0x20] sm:$0xf]
        %v608 = vld [vmem:[%s4 + $0x24] sm:$0xf]
        %v609 = vld [vmem:[%s4 + $0x28] sm:$0xf]
        %v610 = vld [vmem:[%s4 + $0x2c] sm:$0xf]
        %v611 = vld [vmem:[%s384] sm:$0xff]
        %v612 = vpack.c.bf16 %v611, %v611
        %v625 = vunpack.c.l.b16 %v599
        %v626 = vunpack.c.l.b16 %v600
        %v627 = vunpack.c.l.b16 %v601
        %v628 = vunpack.c.l.b16 %v602
        %v629 = vunpack.c.l.b16 %v603
        %v630 = vunpack.c.l.b16 %v604
        %v631 = vunpack.c.l.b16 %v605
        %v632 = vunpack.c.l.b16 %v606
        %v633 = vunpack.c.l.b16 %v607
        %v634 = vunpack.c.l.b16 %v608
        %v635 = vunpack.c.l.b16 %v609
        %v636 = vunpack.c.l.b16 %v610
        %v637 = vpack.c.b16 %v626, %v625
        %v638 = vpack.c.b16 %v628, %v627
        %v639 = vpack.c.b16 %v630, %v629
        %v640 = vpack.c.b16 %v632, %v631
        %v641 = vpack.c.b16 %v634, %v633
        %v642 = vpack.c.b16 %v636, %v635
        %vm643 = vcmask 64512
        %v645 = vsel %vm643, %v637, 0
        %v648 = vsel %vm643, %v638, 0
        %v651 = vsel %vm643, %v639, 0
        %v654 = vsel %vm643, %v640, 0
        %v657 = vsel %vm643, %v641, 0
        %v660 = vsel %vm643, %v642, 0
        %vm662 = vcmask 1043456
        %v664 = vsel %vm662, %v612, 0
        %666 = vmatprep.subr.bf16.mxu0 0
        %667 = vmatpush1.bf16.msra.mxu0 %v664
        %668 = vmatprep.subr.bf16.mxu0 0
        %669 = vmatpush1.bf16.msra.mxu0 0
        %670 = vmatprep.subr.bf16.mxu0 0
        %671 = vmatpush1.bf16.msra.mxu0 0
        %672 = vmatprep.subr.bf16.mxu0 0
        %673 = vmatpush1.bf16.msra.mxu0 0
        %674 = vmatprep.subr.bf16.mxu0 0
        %675 = vmatpush1.bf16.msra.mxu0 0
        %676 = vmatprep.subr.bf16.mxu0 0
        %677 = vmatpush1.bf16.msra.mxu0 0
        %678 = vmatprep.subr.bf16.mxu0 0
        %679 = vmatpush1.bf16.msra.mxu0 0
        %680 = vmatprep.subr.bf16.mxu0 0
        %681 = vmatpush1.bf16.msra.mxu0 0
        %682 = vmatprep.subr.bf16.mxu0 0
        %683 = vmatpush1.bf16.msra.mxu0 0
        %684 = vmatprep.subr.bf16.mxu0 0
        %685 = vmatpush1.bf16.msra.mxu0 0
        %686 = vmatprep.subr.bf16.mxu0 0
        %687 = vmatpush1.bf16.msra.mxu0 0
        %688 = vmatprep.subr.bf16.mxu0 0
        %689 = vmatpush1.bf16.msra.mxu0 0
        %690 = vmatprep.subr.bf16.mxu0 0
        %691 = vmatpush1.bf16.msra.mxu0 0
        %692 = vmatprep.subr.bf16.mxu0 0
        %693 = vmatpush1.bf16.msra.mxu0 0
        %694 = vmatprep.subr.bf16.mxu0 0
        %695 = vmatpush1.bf16.msra.mxu0 0
        %696 = vmatprep.subr.bf16.mxu0 0
        %697 = vmatpush1.bf16.msra.mxu0 0
        %698 = vmatprep.mubr.bf16.mxu0 0
        %699 = vmatmul.mubr.bf16.gmra.mrb[0].mxu0 %v645
        %v700 = vpop.f32.mrb[0].mxu0
        %v701 = vadd.f32 0.0, %v700
        %v702 = vpop.f32.mrb[0].mxu0
        %v703 = vpop.f32.mrb[0].mxu0
        %v704 = vadd.f32 0.0, %v703
        %v705 = vpop.f32.mrb[0].mxu0
        %706 = vmatprep.mubr.bf16.mxu0 0
        %707 = vmatmul.mubr.bf16.gmra.mrb[0].mxu0 %v648
        %v708 = vpop.f32.mrb[0].mxu0
        %v709 = vadd.f32 0.0, %v708
        %v710 = vpop.f32.mrb[0].mxu0
        %v711 = vpop.f32.mrb[0].mxu0
        %v712 = vadd.f32 0.0, %v711
        %v713 = vpop.f32.mrb[0].mxu0
        %714 = vmatprep.mubr.bf16.mxu0 0
        %715 = vmatmul.mubr.bf16.gmra.mrb[0].mxu0 %v651
        %v716 = vpop.f32.mrb[0].mxu0
        %v717 = vadd.f32 0.0, %v716
        %v718 = vpop.f32.mrb[0].mxu0
        %v719 = vpop.f32.mrb[0].mxu0
        %v720 = vadd.f32 0.0, %v719
        %v721 = vpop.f32.mrb[0].mxu0
        %722 = vmatprep.mubr.bf16.mxu0 0
        %723 = vmatmul.mubr.bf16.gmra.mrb[0].mxu0 %v654
        %v724 = vpop.f32.mrb[0].mxu0
        %v725 = vadd.f32 0.0, %v724
        %v726 = vpop.f32.mrb[0].mxu0
        %v727 = vpop.f32.mrb[0].mxu0
        %v728 = vadd.f32 0.0, %v727
        %v729 = vpop.f32.mrb[0].mxu0
        %730 = vmatprep.mubr.bf16.mxu0 0
        %731 = vmatmul.mubr.bf16.gmra.mrb[0].mxu0 %v657
        %v732 = vpop.f32.mrb[0].mxu0
        %v733 = vadd.f32 0.0, %v732
        %v734 = vpop.f32.mrb[0].mxu0
        %v735 = vpop.f32.mrb[0].mxu0
        %v736 = vadd.f32 0.0, %v735
        %v737 = vpop.f32.mrb[0].mxu0
        %738 = vmatprep.mubr.bf16.mxu0 0
        %739 = vmatmul.mubr.bf16.gmra.mrb[0].mxu0 %v660
        %v740 = vpop.f32.mrb[0].mxu0
        %v741 = vadd.f32 0.0, %v740
        %v742 = vpop.f32.mrb[0].mxu0
        %v743 = vpop.f32.mrb[0].mxu0
        %v744 = vadd.f32 0.0, %v743
        %v745 = vpop.f32.mrb[0].mxu0
        %746 = vdwg.mxu0
        %v747 = vld [vmem:[%s5] sm:$0xf]
        %v748 = vld [vmem:[%s5 + $0x4] sm:$0xf]
        %v749 = vld [vmem:[%s5 + $0x8] sm:$0xf]
        %v750 = vld [vmem:[%s5 + $0xc] sm:$0xf]
        %v751 = vld [vmem:[%s5 + $0x10] sm:$0xf]
        %v752 = vld [vmem:[%s5 + $0x14] sm:$0xf]
        %v753 = vld [vmem:[%s5 + $0x18] sm:$0xf]
        %v754 = vld [vmem:[%s5 + $0x1c] sm:$0xf]
        %v755 = vld [vmem:[%s5 + $0x20] sm:$0xf]
        %v756 = vld [vmem:[%s5 + $0x24] sm:$0xf]
        %v757 = vld [vmem:[%s5 + $0x28] sm:$0xf]
        %v758 = vld [vmem:[%s5 + $0x2c] sm:$0xf]
        %v759 = vld [vmem:[%s5 + $0x30] sm:$0xf]
        %v760 = vld [vmem:[%s5 + $0x34] sm:$0xf]
        %v761 = vld [vmem:[%s5 + $0x38] sm:$0xf]
        %v762 = vld [vmem:[%s5 + $0x3c] sm:$0xf]
        %v763 = vld [vmem:[%s9 + $0x20] sm:$0xff]
        %v764 = vld [vmem:[%s9 + $0x28] sm:$0xff]
        %v765 = vld [vmem:[%s9 + $0x30] sm:$0xff]
        %v766 = vld [vmem:[%s9 + $0x38] sm:$0xff]
        %v767 = vld [vmem:[%s9 + $0x40] sm:$0xff]
        %v768 = vld [vmem:[%s9 + $0x48] sm:$0xff]
        %v769 = vld [vmem:[%s9 + $0x50] sm:$0xff]
        %v770 = vld [vmem:[%s9 + $0x58] sm:$0xff]
        %v771 = vld [vmem:[%s6] sm:$0xf]
        %v772 = vld [vmem:[%s9 + $0x60] sm:$0xff]
        %v773 = vadd.f32 %v585, %v717
        %v774 = vadd.f32 %v588, %v720
        %v775 = vadd.f32 %v593, %v725
        %v776 = vadd.f32 %v596, %v728
        %v777 = vmul.f32 %v773, %v701
        %v778 = vmul.f32 %v774, %v704
        %v779 = vmul.f32 %v775, %v709
        %v780 = vmul.f32 %v776, %v712
        %v781 = vpack.c.bf16 %v778, %v777
        %v782 = vpack.c.bf16 %v780, %v779
        %784 = vset.pattern.permute.xlu0 0
        %785 = vperm.xlu0 %784, %v763
        %v786 = vpop.permute.xlu0 %785
        %789 = vset.pattern.permute.xlu0 0
        %790 = vperm.xlu0 %789, %v764
        %v791 = vpop.permute.xlu0 %790
        %794 = vset.pattern.permute.xlu0 0
        %795 = vperm.xlu0 %794, %v765
        %v796 = vpop.permute.xlu0 %795
        %799 = vset.pattern.permute.xlu0 0
        %800 = vperm.xlu0 %799, %v766
        %v801 = vpop.permute.xlu0 %800
        %804 = vset.pattern.permute.xlu0 0
        %805 = vperm.xlu0 %804, %v767
        %v806 = vpop.permute.xlu0 %805
        %809 = vset.pattern.permute.xlu0 0
        %810 = vperm.xlu0 %809, %v768
        %v811 = vpop.permute.xlu0 %810
        %814 = vset.pattern.permute.xlu0 0
        %815 = vperm.xlu0 %814, %v769
        %v816 = vpop.permute.xlu0 %815
        %819 = vset.pattern.permute.xlu0 0
        %820 = vperm.xlu0 %819, %v770
        %v821 = vpop.permute.xlu0 %820
        %v831 = vunpack.c.l.b16 %v747
        %v832 = vunpack.c.l.b16 %v748
        %v833 = vunpack.c.l.b16 %v749
        %v834 = vunpack.c.l.b16 %v750
        %v835 = vunpack.c.l.b16 %v751
        %v836 = vunpack.c.l.b16 %v752
        %v837 = vunpack.c.l.b16 %v753
        %v838 = vunpack.c.l.b16 %v754
        %v839 = vpack.c.b16 %v832, %v831
        %v840 = vpack.c.b16 %v834, %v833
        %v841 = vpack.c.b16 %v836, %v835
        %v842 = vpack.c.b16 %v838, %v837
        %v844 = vsel %vm444, %v839, 0
        %v847 = vsel %vm444, %v840, 0
        %v850 = vsel %vm444, %v841, 0
        %v853 = vsel %vm444, %v842, 0
        %855 = vmatprep.subr.bf16.mxu0 0
        %856 = vmatpush1.bf16.msra.mxu0 %v781
        %857 = vmatprep.subr.bf16.mxu0 0
        %858 = vmatpush1.bf16.msra.mxu0 %v782
        %859 = vmatprep.subr.bf16.mxu0 0
        %860 = vmatpush1.bf16.msra.mxu0 0
        %861 = vmatprep.subr.bf16.mxu0 0
        %862 = vmatpush1.bf16.msra.mxu0 0
        %863 = vmatprep.subr.bf16.mxu0 0
        %864 = vmatpush1.bf16.msra.mxu0 0
        %865 = vmatprep.subr.bf16.mxu0 0
        %866 = vmatpush1.bf16.msra.mxu0 0
        %867 = vmatprep.subr.bf16.mxu0 0
        %868 = vmatpush1.bf16.msra.mxu0 0
        %869 = vmatprep.subr.bf16.mxu0 0
        %870 = vmatpush1.bf16.msra.mxu0 0
        %871 = vmatprep.subr.bf16.mxu0 0
        %872 = vmatpush1.bf16.msra.mxu0 0
        %873 = vmatprep.subr.bf16.mxu0 0
        %874 = vmatpush1.bf16.msra.mxu0 0
        %875 = vmatprep.subr.bf16.mxu0 0
        %876 = vmatpush1.bf16.msra.mxu0 0
        %877 = vmatprep.subr.bf16.mxu0 0
        %878 = vmatpush1.bf16.msra.mxu0 0
        %879 = vmatprep.subr.bf16.mxu0 0
        %880 = vmatpush1.bf16.msra.mxu0 0
        %881 = vmatprep.subr.bf16.mxu0 0
        %882 = vmatpush1.bf16.msra.mxu0 0
        %883 = vmatprep.subr.bf16.mxu0 0
        %884 = vmatpush1.bf16.msra.mxu0 0
        %885 = vmatprep.subr.bf16.mxu0 0
        %886 = vmatpush1.bf16.msra.mxu0 0
        %887 = vmatprep.mubr.bf16.mxu0 0
        %888 = vmatmul.mubr.bf16.gmra.mrb[0].mxu0 %v844
        %v889 = vpop.f32.mrb[0].mxu0
        %v890 = vadd.f32 %v786, %v889
        %v891 = vpop.f32.mrb[0].mxu0
        %v892 = vpop.f32.mrb[0].mxu0
        %v893 = vadd.f32 %v791, %v892
        %v894 = vpop.f32.mrb[0].mxu0
        %895 = vmatprep.mubr.bf16.mxu0 0
        %896 = vmatmul.mubr.bf16.gmra.mrb[0].mxu0 %v847
        %v897 = vpop.f32.mrb[0].mxu0
        %v898 = vadd.f32 %v796, %v897
        %v899 = vpop.f32.mrb[0].mxu0
        %v900 = vpop.f32.mrb[0].mxu0
        %v901 = vadd.f32 %v801, %v900
        %v902 = vpop.f32.mrb[0].mxu0
        %903 = vmatprep.mubr.bf16.mxu0 0
        %904 = vmatmul.mubr.bf16.gmra.mrb[0].mxu0 %v850
        %v905 = vpop.f32.mrb[0].mxu0
        %v906 = vadd.f32 %v806, %v905
        %v907 = vpop.f32.mrb[0].mxu0
        %v908 = vpop.f32.mrb[0].mxu0
        %v909 = vadd.f32 %v811, %v908
        %v910 = vpop.f32.mrb[0].mxu0
        %911 = vmatprep.mubr.bf16.mxu0 0
        %912 = vmatmul.mubr.bf16.gmra.mrb[0].mxu0 %v853
        %v913 = vpop.f32.mrb[0].mxu0
        %v914 = vadd.f32 %v816, %v913
        %v915 = vpop.f32.mrb[0].mxu0
        %v916 = vpop.f32.mrb[0].mxu0
        %v917 = vadd.f32 %v821, %v916
        %v918 = vpop.f32.mrb[0].mxu0
        %919 = vdwg.mxu0
        %v920 = vmax.f32 %v890, 0.0
        %v921 = vmax.f32 %v893, 0.0
        %v922 = vmax.f32 %v898, 0.0
        %v923 = vmax.f32 %v901, 0.0
        %v924 = vmax.f32 %v906, 0.0
        %v925 = vmax.f32 %v909, 0.0
        %v926 = vmax.f32 %v914, 0.0
        %v927 = vmax.f32 %v917, 0.0
        %v928 = vpack.c.bf16 %v921, %v920
        %v929 = vpack.c.bf16 %v923, %v922
        %v930 = vpack.c.bf16 %v925, %v924
        %v931 = vpack.c.bf16 %v927, %v926
        %933 = vset.pattern.permute.xlu0 0
        %934 = vperm.xlu0 %933, %v772
        %v935 = vpop.permute.xlu0 %934
        %vm937 = vcmask 523264
        %v939 = vsel %vm937, %v771, 0
        %941 = vmatprep.subr.bf16.mxu0 0
        %942 = vmatpush1.bf16.msra.mxu0 %v928
        %943 = vmatprep.subr.bf16.mxu0 0
        %944 = vmatpush1.bf16.msra.mxu0 %v929
        %945 = vmatprep.subr.bf16.mxu0 0
        %946 = vmatpush1.bf16.msra.mxu0 %v930
        %947 = vmatprep.subr.bf16.mxu0 0
        %948 = vmatpush1.bf16.msra.mxu0 %v931
        %949 = vmatprep.subr.bf16.mxu0 0
        %950 = vmatpush1.bf16.msra.mxu0 0
        %951 = vmatprep.subr.bf16.mxu0 0
        %952 = vmatpush1.bf16.msra.mxu0 0
        %953 = vmatprep.subr.bf16.mxu0 0
        %954 = vmatpush1.bf16.msra.mxu0 0
        %955 = vmatprep.subr.bf16.mxu0 0
        %956 = vmatpush1.bf16.msra.mxu0 0
        %957 = vmatprep.subr.bf16.mxu0 0
        %958 = vmatpush1.bf16.msra.mxu0 0
        %959 = vmatprep.subr.bf16.mxu0 0
        %960 = vmatpush1.bf16.msra.mxu0 0
        %961 = vmatprep.subr.bf16.mxu0 0
        %962 = vmatpush1.bf16.msra.mxu0 0
        %963 = vmatprep.subr.bf16.mxu0 0
        %964 = vmatpush1.bf16.msra.mxu0 0
        %965 = vmatprep.subr.bf16.mxu0 0
        %966 = vmatpush1.bf16.msra.mxu0 0
        %967 = vmatprep.subr.bf16.mxu0 0
        %968 = vmatpush1.bf16.msra.mxu0 0
        %969 = vmatprep.subr.bf16.mxu0 0
        %970 = vmatpush1.bf16.msra.mxu0 0
        %971 = vmatprep.subr.bf16.mxu0 0
        %972 = vmatpush1.bf16.msra.mxu0 0
        %973 = vmatprep.mubr.bf16.mxu0 0
        %974 = vmatmul.mubr.bf16.gmra.mrb[0].mxu0 %v939
        %v975 = vpop.f32.mrb[0].mxu0
        %v976 = vadd.f32 %v935, %v975
        %v977 = vpop.f32.mrb[0].mxu0
        %v978 = vpop.f32.mrb[0].mxu0
        %v979 = vpop.f32.mrb[0].mxu0
        %980 = vdwg.mxu0
        %v981 = vmul.f32 %v976, %v701
        %v982 = vmax.f32 %v981, -4.0
        %v983 = vmin.f32 %v982, 3.999999
        %v984 = vsub.f32 %v983, -4.0
        %v985 = vmul.f32 %v984, 32.0
        %v986 = vfloor.f32 %v985
        %v987 = vmul.f32 %v986, 0.03125
        %v988 = vadd.f32 %v987, -4.0
        %v989 = vpack.c.bf16 %v988, %v988
        %v990 = vld [vmem:[%s8] sm:$0xf]
        %v991 = vld [vmem:[%s8 + $0x4] sm:$0xf]
        %v992 = vld [vmem:[%s8 + $0x8] sm:$0xf]
        %v993 = vld [vmem:[%s8 + $0xc] sm:$0xf]
        %v994 = vld [vmem:[%s9 + $0x68] sm:$0xff]
        %v995 = vld [vmem:[%s9 + $0x70] sm:$0xff]
        %v996 = vld [vmem:[%s9 + $0x78] sm:$0xff]
        %v997 = vld [vmem:[%s9 + $0x80] sm:$0xff]
        %999 = vset.pattern.permute.xlu0 0
        %1000 = vperm.xlu0 %999, %v994
        %v1001 = vpop.permute.xlu0 %1000
        %1004 = vset.pattern.permute.xlu0 0
        %1005 = vperm.xlu0 %1004, %v995
        %v1006 = vpop.permute.xlu0 %1005
        %1009 = vset.pattern.permute.xlu0 0
        %1010 = vperm.xlu0 %1009, %v996
        %v1011 = vpop.permute.xlu0 %1010
        %1014 = vset.pattern.permute.xlu0 0
        %1015 = vperm.xlu0 %1014, %v997
        %v1016 = vpop.permute.xlu0 %1015
        %v1022 = vunpack.c.l.b16 %v990
        %v1023 = vunpack.c.l.b16 %v991
        %v1024 = vunpack.c.l.b16 %v992
        %v1025 = vunpack.c.l.b16 %v993
        %v1026 = vpack.c.b16 %v1023, %v1022
        %v1027 = vpack.c.b16 %v1025, %v1024
        %v1029 = vsel %vm643, %v1026, 0
        %v1032 = vsel %vm643, %v1027, 0
        %v1035 = vsel %vm662, %v989, 0
        %1037 = vmatprep.subr.bf16.mxu0 0
        %1038 = vmatpush1.bf16.msra.mxu0 %v1035
        %1039 = vmatprep.subr.bf16.mxu0 0
        %1040 = vmatpush1.bf16.msra.mxu0 0
        %1041 = vmatprep.subr.bf16.mxu0 0
        %1042 = vmatpush1.bf16.msra.mxu0 0
        %1043 = vmatprep.subr.bf16.mxu0 0
        %1044 = vmatpush1.bf16.msra.mxu0 0
        %1045 = vmatprep.subr.bf16.mxu0 0
        %1046 = vmatpush1.bf16.msra.mxu0 0
        %1047 = vmatprep.subr.bf16.mxu0 0
        %1048 = vmatpush1.bf16.msra.mxu0 0
        %1049 = vmatprep.subr.bf16.mxu0 0
        %1050 = vmatpush1.bf16.msra.mxu0 0
        %1051 = vmatprep.subr.bf16.mxu0 0
        %1052 = vmatpush1.bf16.msra.mxu0 0
        %1053 = vmatprep.subr.bf16.mxu0 0
        %1054 = vmatpush1.bf16.msra.mxu0 0
        %1055 = vmatprep.subr.bf16.mxu0 0
        %1056 = vmatpush1.bf16.msra.mxu0 0
        %1057 = vmatprep.subr.bf16.mxu0 0
        %1058 = vmatpush1.bf16.msra.mxu0 0
        %1059 = vmatprep.subr.bf16.mxu0 0
        %1060 = vmatpush1.bf16.msra.mxu0 0
        %1061 = vmatprep.subr.bf16.mxu0 0
        %1062 = vmatpush1.bf16.msra.mxu0 0
        %1063 = vmatprep.subr.bf16.mxu0 0
        %1064 = vmatpush1.bf16.msra.mxu0 0
        %1065 = vmatprep.subr.bf16.mxu0 0
        %1066 = vmatpush1.bf16.msra.mxu0 0
        %1067 = vmatprep.subr.bf16.mxu0 0
        %1068 = vmatpush1.bf16.msra.mxu0 0
        %1069 = vmatprep.mubr.bf16.mxu0 0
        %1070 = vmatmul.mubr.bf16.gmra.mrb[0].mxu0 %v1029
        %v1071 = vpop.f32.mrb[0].mxu0
        %v1072 = vadd.f32 %v1001, %v1071
        %v1073 = vpop.f32.mrb[0].mxu0
        %v1074 = vpop.f32.mrb[0].mxu0
        %v1075 = vadd.f32 %v1006, %v1074
        %v1076 = vpop.f32.mrb[0].mxu0
        %1077 = vmatprep.mubr.bf16.mxu0 0
        %1078 = vmatmul.mubr.bf16.gmra.mrb[0].mxu0 %v1032
        %v1079 = vpop.f32.mrb[0].mxu0
        %v1080 = vadd.f32 %v1011, %v1079
        %v1081 = vpop.f32.mrb[0].mxu0
        %v1082 = vpop.f32.mrb[0].mxu0
        %v1083 = vadd.f32 %v1016, %v1082
        %v1084 = vpop.f32.mrb[0].mxu0
        %1085 = vdwg.mxu0
        %v1086 = vadd.f32 %v585, %v1072
        %v1087 = vadd.f32 %v588, %v1075
        %v1088 = vadd.f32 %v593, %v1080
        %v1089 = vadd.f32 %v596, %v1083
        %v1090 = vld [vmem:[%s9 + $0x88] sm:$0xff]
        %v1091 = vld [vmem:[%s9 + $0x90] sm:$0xff]
        %v1092 = vld [vmem:[%s9 + $0x98] sm:$0xff]
        %v1093 = vld [vmem:[%s9 + $0xa0] sm:$0xff]
        %v1094 = vld [vmem:[%s9 + $0xa8] sm:$0xff]
        %v1095 = vld [vmem:[%s9 + $0xb0] sm:$0xff]
        %v1096 = vld [vmem:[%s9 + $0xb8] sm:$0xff]
        %v1097 = vld [vmem:[%s9 + $0xc0] sm:$0xff]
        %v1098 = vld [vmem:[%s7] sm:$0xf]
        %v1099 = vld [vmem:[%s7 + $0x4] sm:$0xf]
        %v1100 = vld [vmem:[%s7 + $0x8] sm:$0xf]
        %v1101 = vld [vmem:[%s9 + $0xc8] sm:$0xff]
        %v1102 = vld [vmem:[%s9 + $0xd0] sm:$0xff]
        %v1103 = vld [vmem:[%s9 + $0xd8] sm:$0xff]
        %v1104 = vadd.f32 %v1086, %v733
        %v1105 = vadd.f32 %v1087, %v736
        %v1106 = vadd.f32 %v1088, %v741
        %v1107 = vadd.f32 %v1089, %v744
        %v1108 = vmul.f32 %v1104, %v701
        %v1109 = vmul.f32 %v1105, %v704
        %v1110 = vmul.f32 %v1106, %v709
        %v1111 = vmul.f32 %v1107, %v712
        %v1112 = vpack.c.bf16 %v1109, %v1108
        %v1113 = vpack.c.bf16 %v1111, %v1110
        %1115 = vset.pattern.permute.xlu0 0
        %1116 = vperm.xlu0 %1115, %v1090
        %v1117 = vpop.permute.xlu0 %1116
        %1120 = vset.pattern.permute.xlu0 0
        %1121 = vperm.xlu0 %1120, %v1091
        %v1122 = vpop.permute.xlu0 %1121
        %1125 = vset.pattern.permute.xlu0 0
        %1126 = vperm.xlu0 %1125, %v1092
        %v1127 = vpop.permute.xlu0 %1126
        %1130 = vset.pattern.permute.xlu0 0
        %1131 = vperm.xlu0 %1130, %v1093
        %v1132 = vpop.permute.xlu0 %1131
        %1135 = vset.pattern.permute.xlu0 0
        %1136 = vperm.xlu0 %1135, %v1094
        %v1137 = vpop.permute.xlu0 %1136
        %1140 = vset.pattern.permute.xlu0 0
        %1141 = vperm.xlu0 %1140, %v1095
        %v1142 = vpop.permute.xlu0 %1141
        %1145 = vset.pattern.permute.xlu0 0
        %1146 = vperm.xlu0 %1145, %v1096
        %v1147 = vpop.permute.xlu0 %1146
        %1150 = vset.pattern.permute.xlu0 0
        %1151 = vperm.xlu0 %1150, %v1097
        %v1152 = vpop.permute.xlu0 %1151
        %v1162 = vunpack.c.l.b16 %v755
        %v1163 = vunpack.c.l.b16 %v756
        %v1164 = vunpack.c.l.b16 %v757
        %v1165 = vunpack.c.l.b16 %v758
        %v1166 = vunpack.c.l.b16 %v759
        %v1167 = vunpack.c.l.b16 %v760
        %v1168 = vunpack.c.l.b16 %v761
        %v1169 = vunpack.c.l.b16 %v762
        %v1170 = vpack.c.b16 %v1163, %v1162
        %v1171 = vpack.c.b16 %v1165, %v1164
        %v1172 = vpack.c.b16 %v1167, %v1166
        %v1173 = vpack.c.b16 %v1169, %v1168
        %v1175 = vsel %vm444, %v1170, 0
        %v1178 = vsel %vm444, %v1171, 0
        %v1181 = vsel %vm444, %v1172, 0
        %v1184 = vsel %vm444, %v1173, 0
        %1186 = vmatprep.subr.bf16.mxu0 0
        %1187 = vmatpush1.bf16.msra.mxu0 %v1112
        %1188 = vmatprep.subr.bf16.mxu0 0
        %1189 = vmatpush1.bf16.msra.mxu0 %v1113
        %1190 = vmatprep.subr.bf16.mxu0 0
        %1191 = vmatpush1.bf16.msra.mxu0 0
        %1192 = vmatprep.subr.bf16.mxu0 0
        %1193 = vmatpush1.bf16.msra.mxu0 0
        %1194 = vmatprep.subr.bf16.mxu0 0
        %1195 = vmatpush1.bf16.msra.mxu0 0
        %1196 = vmatprep.subr.bf16.mxu0 0
        %1197 = vmatpush1.bf16.msra.mxu0 0
        %1198 = vmatprep.subr.bf16.mxu0 0
        %1199 = vmatpush1.bf16.msra.mxu0 0
        %1200 = vmatprep.subr.bf16.mxu0 0
        %1201 = vmatpush1.bf16.msra.mxu0 0
        %1202 = vmatprep.subr.bf16.mxu0 0
        %1203 = vmatpush1.bf16.msra.mxu0 0
        %1204 = vmatprep.subr.bf16.mxu0 0
        %1205 = vmatpush1.bf16.msra.mxu0 0
        %1206 = vmatprep.subr.bf16.mxu0 0
        %1207 = vmatpush1.bf16.msra.mxu0 0
        %1208 = vmatprep.subr.bf16.mxu0 0
        %1209 = vmatpush1.bf16.msra.mxu0 0
        %1210 = vmatprep.subr.bf16.mxu0 0
        %1211 = vmatpush1.bf16.msra.mxu0 0
        %1212 = vmatprep.subr.bf16.mxu0 0
        %1213 = vmatpush1.bf16.msra.mxu0 0
        %1214 = vmatprep.subr.bf16.mxu0 0
        %1215 = vmatpush1.bf16.msra.mxu0 0
        %1216 = vmatprep.subr.bf16.mxu0 0
        %1217 = vmatpush1.bf16.msra.mxu0 0
        %1218 = vmatprep.mubr.bf16.mxu0 0
        %1219 = vmatmul.mubr.bf16.gmra.mrb[0].mxu0 %v1175
        %v1220 = vpop.f32.mrb[0].mxu0
        %v1221 = vadd.f32 %v1117, %v1220
        %v1222 = vpop.f32.mrb[0].mxu0
        %v1223 = vpop.f32.mrb[0].mxu0
        %v1224 = vadd.f32 %v1122, %v1223
        %v1225 = vpop.f32.mrb[0].mxu0
        %1226 = vmatprep.mubr.bf16.mxu0 0
        %1227 = vmatmul.mubr.bf16.gmra.mrb[0].mxu0 %v1178
        %v1228 = vpop.f32.mrb[0].mxu0
        %v1229 = vadd.f32 %v1127, %v1228
        %v1230 = vpop.f32.mrb[0].mxu0
        %v1231 = vpop.f32.mrb[0].mxu0
        %v1232 = vadd.f32 %v1132, %v1231
        %v1233 = vpop.f32.mrb[0].mxu0
        %1234 = vmatprep.mubr.bf16.mxu0 0
        %1235 = vmatmul.mubr.bf16.gmra.mrb[0].mxu0 %v1181
        %v1236 = vpop.f32.mrb[0].mxu0
        %v1237 = vadd.f32 %v1137, %v1236
        %v1238 = vpop.f32.mrb[0].mxu0
        %v1239 = vpop.f32.mrb[0].mxu0
        %v1240 = vadd.f32 %v1142, %v1239
        %v1241 = vpop.f32.mrb[0].mxu0
        %1242 = vmatprep.mubr.bf16.mxu0 0
        %1243 = vmatmul.mubr.bf16.gmra.mrb[0].mxu0 %v1184
        %v1244 = vpop.f32.mrb[0].mxu0
        %v1245 = vadd.f32 %v1147, %v1244
        %v1246 = vpop.f32.mrb[0].mxu0
        %v1247 = vpop.f32.mrb[0].mxu0
        %v1248 = vadd.f32 %v1152, %v1247
        %v1249 = vpop.f32.mrb[0].mxu0
        %1250 = vdwg.mxu0
        %v1251 = vmax.f32 %v1221, 0.0
        %v1252 = vmax.f32 %v1224, 0.0
        %v1253 = vmax.f32 %v1229, 0.0
        %v1254 = vmax.f32 %v1232, 0.0
        %v1255 = vmax.f32 %v1237, 0.0
        %v1256 = vmax.f32 %v1240, 0.0
        %v1257 = vmax.f32 %v1245, 0.0
        %v1258 = vmax.f32 %v1248, 0.0
        %v1259 = vpack.c.bf16 %v1252, %v1251
        %v1260 = vpack.c.bf16 %v1254, %v1253
        %v1261 = vpack.c.bf16 %v1256, %v1255
        %v1262 = vpack.c.bf16 %v1258, %v1257
        %1264 = vset.pattern.permute.xlu0 0
        %1265 = vperm.xlu0 %1264, %v1101
        %v1266 = vpop.permute.xlu0 %1265
        %1269 = vset.pattern.permute.xlu0 0
        %1270 = vperm.xlu0 %1269, %v1102
        %v1271 = vpop.permute.xlu0 %1270
        %1274 = vset.pattern.permute.xlu0 0
        %1275 = vperm.xlu0 %1274, %v1103
        %v1276 = vpop.permute.xlu0 %1275
        %v1281 = vunpack.c.l.b16 %v1098
        %v1282 = vunpack.c.l.b16 %v1099
        %v1283 = vunpack.c.l.b16 %v1100
        %v1284 = vpack.c.b16 %v1282, %v1281
        %v1285 = vpack.c.b16 %v1283, %v1283
        %v1287 = vsel %vm937, %v1284, 0
        %v1290 = vsel %vm937, %v1285, 0
        %1292 = vmatprep.subr.bf16.mxu0 0
        %1293 = vmatpush1.bf16.msra.mxu0 %v1259
        %1294 = vmatprep.subr.bf16.mxu0 0
        %1295 = vmatpush1.bf16.msra.mxu0 %v1260
        %1296 = vmatprep.subr.bf16.mxu0 0
        %1297 = vmatpush1.bf16.msra.mxu0 %v1261
        %1298 = vmatprep.subr.bf16.mxu0 0
        %1299 = vmatpush1.bf16.msra.mxu0 %v1262
        %1300 = vmatprep.subr.bf16.mxu0 0
        %1301 = vmatpush1.bf16.msra.mxu0 0
        %1302 = vmatprep.subr.bf16.mxu0 0
        %1303 = vmatpush1.bf16.msra.mxu0 0
        %1304 = vmatprep.subr.bf16.mxu0 0
        %1305 = vmatpush1.bf16.msra.mxu0 0
        %1306 = vmatprep.subr.bf16.mxu0 0
        %1307 = vmatpush1.bf16.msra.mxu0 0
        %1308 = vmatprep.subr.bf16.mxu0 0
        %1309 = vmatpush1.bf16.msra.mxu0 0
        %1310 = vmatprep.subr.bf16.mxu0 0
        %1311 = vmatpush1.bf16.msra.mxu0 0
        %1312 = vmatprep.subr.bf16.mxu0 0
        %1313 = vmatpush1.bf16.msra.mxu0 0
        %1314 = vmatprep.subr.bf16.mxu0 0
        %1315 = vmatpush1.bf16.msra.mxu0 0
        %1316 = vmatprep.subr.bf16.mxu0 0
        %1317 = vmatpush1.bf16.msra.mxu0 0
        %1318 = vmatprep.subr.bf16.mxu0 0
        %1319 = vmatpush1.bf16.msra.mxu0 0
        %1320 = vmatprep.subr.bf16.mxu0 0
        %1321 = vmatpush1.bf16.msra.mxu0 0
        %1322 = vmatprep.subr.bf16.mxu0 0
        %1323 = vmatpush1.bf16.msra.mxu0 0
        %1324 = vmatprep.mubr.bf16.mxu0 0
        %1325 = vmatmul.mubr.bf16.gmra.mrb[0].mxu0 %v1287
        %v1326 = vpop.f32.mrb[0].mxu0
        %v1327 = vadd.f32 %v1266, %v1326
        %v1328 = vpop.f32.mrb[0].mxu0
        %v1329 = vpop.f32.mrb[0].mxu0
        %v1330 = vadd.f32 %v1271, %v1329
        %v1331 = vpop.f32.mrb[0].mxu0
        %1332 = vmatprep.mubr.bf16.mxu0 0
        %1333 = vmatmul.mubr.bf16.gmra.mrb[0].mxu0 %v1290
        %v1334 = vpop.f32.mrb[0].mxu0
        %v1335 = vadd.f32 %v1276, %v1334
        %v1336 = vpop.f32.mrb[0].mxu0
        %v1337 = vpop.f32.mrb[0].mxu0
        %v1338 = vpop.f32.mrb[0].mxu0
        %1339 = vdwg.mxu0
        %v1340 = vmul.f32 %v1327, %v701
        %v1341 = vmul.f32 %v1330, %v704
        %v1342 = vmul.f32 %v1335, %v709
        %1343 = vst [vmem:[%s374] sm:$0xff] %v1340
        %1344 = vst [vmem:[%s374 + $0x8] sm:$0xff] %v1341
        %1345 = vst [vmem:[%s374 + $0x10] sm:$0xff] %v1342
        %1346 = vst [vmem:[%s388] sm:$0xff] %v981
        %s1347 = sand.u32 %s246, 1
        %s1348 = sand.u32 %s246, 1
        %s1349 = smul.addr %s1348, 24
        %s1350 = scalar_lea.vmem [#allocation2], %s1349
        %p1351 = scmp.lt.s32.totalorder %s23, 2
        %s1352 = scalar_select %p1351, %s23, 2
        %s1353 = smul.addr %s1352, 8
        %s1354 = scalar_lea.vmem %s11, %s1353
        // Predicated region
        $region61: #{fast_npss_forward.1} parent=59 // pred_check
          %p1355 = pneg %p256
        $region62: #{fast_npss_forward.1} parent=59 // pred_check_branch
          %1357 = sbr.rel (%p1355) target = $region64
        $region63: #{fast_npss_forward.1} parent=59 // pred_region
          %s1358 = smul.addr %s23, 8
          %s1359 = scalar_lea.vmem %s10, %s1358
          // Predicated region
          $region65: #{fast_npss_forward.1} parent=63 // pred_check
            _
          $region66: #{fast_npss_forward.1} parent=63 // pred_check_branch
            %1361 = sbr.rel (0) target = $region68
          $region67: #{fast_npss_forward.1} parent=63 // pred_region
            // Predicated region
            $region69: #{fast_npss_forward.1} parent=67 // pred_check
              _
            $region70: #{fast_npss_forward.1} parent=67 // pred_check_branch
              %1363 = sbr.rel (0) target = $region72
            $region71: #{fast_npss_forward.1} parent=67 // pred_region
              // Predicated region
              $region84: #{fast_npss_forward.1} parent=71 // pred_check
                _
              $region85: #{fast_npss_forward.1} parent=71 // pred_check_branch
                %1382 = sbr.rel (0) target = $region87
              $region86: #{fast_npss_forward.1} parent=71 // pred_region
                loop: start=0, step=1, limit=1
                $region88: #{fast_npss_forward.1} parent=86 // loop_pre_header
                  _
                $region89: #{fast_npss_forward.1} parent=86 // loop_header
                  %s1384 = sphi 0, %s1388
                  %p1385 = scmp.ge.s32.totalorder %s1384, 1
                  %s1389 = sphi %s1350, %s1350
                  %s1390 = sphi %s1359, %s1359
                $region90: #{fast_npss_forward.1} parent=86 // loop_header_branch
                  %1387 = sbr.rel (%p1385) target = $region94
                $region91: #{fast_npss_forward.1} parent=86 // loop_body
                  %v1391 = vld [vmem:[%s1389] sm:$0xff]
                  %1392 = vst [vmem:[%s1390] sm:$0xff] %v1391
                  %v1393 = vld [vmem:[%s1389 + $0x8] sm:$0xff]
                  %1394 = vst [vmem:[%s1390 + $0x18] sm:$0xff] %v1393
                  %v1395 = vld [vmem:[%s1389 + $0x10] sm:$0xff]
                  %1396 = vst [vmem:[%s1390 + $0x30] sm:$0xff] %v1395
                $region92: #{fast_npss_forward.1} parent=86 // loop_footer
                  %s1388 = sadd.s32 1, %s1384
                $region93: #{fast_npss_forward.1} parent=86 // loop_footer_branch
                  %1383 = sbr.rel target = $region89
                $region94: #{fast_npss_forward.1} parent=86 // loop_exit
                  _
              $region87: #{fast_npss_forward.1} parent=71 // pred_fallthru
                _
              // Predicated region
              $region95: #{fast_npss_forward.1} parent=71 // pred_check
                _
              $region96: #{fast_npss_forward.1} parent=71 // pred_check_branch
                %1398 = sbr.rel target = $region98
              $region97: #{fast_npss_forward.1} parent=71 // pred_region
                _
              $region98: #{fast_npss_forward.1} parent=71 // pred_fallthru
                _
            $region72: #{fast_npss_forward.1} parent=67 // pred_fallthru
              _
            // Predicated region
            $region73: #{fast_npss_forward.1} parent=67 // pred_check
              _
            $region74: #{fast_npss_forward.1} parent=67 // pred_check_branch
              %1365 = sbr.rel target = $region76
            $region75: #{fast_npss_forward.1} parent=67 // pred_region
              loop: start=0, step=1, limit=1
              $region77: #{fast_npss_forward.1} parent=75 // loop_pre_header
                _
              $region78: #{fast_npss_forward.1} parent=75 // loop_header
                %s1368 = sphi 0, %s1372
                %p1369 = scmp.ge.s32.totalorder %s1368, 1
                %s1373 = sphi %s1350, %s1350
                %s1374 = sphi %s1359, %s1359
              $region79: #{fast_npss_forward.1} parent=75 // loop_header_branch
                %1371 = sbr.rel (%p1369) target = $region83
              $region80: #{fast_npss_forward.1} parent=75 // loop_body
                %v1375 = vld [vmem:[%s1373] sm:$0xff]
                %1376 = vst [vmem:[%s1374] sm:$0xff] %v1375
                %v1377 = vld [vmem:[%s1373 + $0x8] sm:$0xff]
                %1378 = vst [vmem:[%s1374 + $0x18] sm:$0xff] %v1377
                %v1379 = vld [vmem:[%s1373 + $0x10] sm:$0xff]
                %1380 = vst [vmem:[%s1374 + $0x30] sm:$0xff] %v1379
              $region81: #{fast_npss_forward.1} parent=75 // loop_footer
                %s1372 = sadd.s32 1, %s1368
              $region82: #{fast_npss_forward.1} parent=75 // loop_footer_branch
                %1367 = sbr.rel target = $region78
              $region83: #{fast_npss_forward.1} parent=75 // loop_exit
                _
            $region76: #{fast_npss_forward.1} parent=67 // pred_fallthru
              _
          $region68: #{fast_npss_forward.1} parent=63 // pred_fallthru
            _
          %1399 = vnop
        $region64: #{fast_npss_forward.1} parent=59 // pred_fallthru
          _
        // Predicated region
        $region99: #{fast_npss_forward.1} parent=59 // pred_check
          %p1400 = pneg %p282
        $region100: #{fast_npss_forward.1} parent=59 // pred_check_branch
          %1402 = sbr.rel (%p1400) target = $region102
        $region101: #{fast_npss_forward.1} parent=59 // pred_region
          _
        $region102: #{fast_npss_forward.1} parent=59 // pred_fallthru
          _
      $region60: #{fast_npss_forward.1} parent=5 // pred_fallthru
        _
      %p1403 = scmp.le.s32.totalorder 2, %s18
      // Predicated region
      $region103: #{fast_npss_forward.1} parent=5 // pred_check
        %p1404 = pneg %p1403
      $region104: #{fast_npss_forward.1} parent=5 // pred_check_branch
        %1406 = sbr.rel (%p1404) target = $region106
      $region105: #{fast_npss_forward.1} parent=5 // pred_region
        %s1407 = ssub.s32 %s18, 2
        // Predicated region
        $region107: #{fast_npss_forward.1} parent=105 // pred_check
          %p1408 = pneg %p262
        $region108: #{fast_npss_forward.1} parent=105 // pred_check_branch
          %1410 = sbr.rel (%p1408) target = $region110
        $region109: #{fast_npss_forward.1} parent=105 // pred_region
          %s1411 = sand.u32 %s247, 1
          %s1412 = sand.u32 %s247, 1
          %s1413 = smul.addr %s1412, 24
          %s1414 = scalar_lea.vmem [#allocation2], %s1413
        $region110: #{fast_npss_forward.1} parent=105 // pred_fallthru
          _
        // Predicated region
        $region111: #{fast_npss_forward.1} parent=105 // pred_check
          %p1415 = pneg %p288
        $region112: #{fast_npss_forward.1} parent=105 // pred_check_branch
          %1417 = sbr.rel (%p1415) target = $region114
        $region113: #{fast_npss_forward.1} parent=105 // pred_region
          %p1418 = scmp.lt.s32.totalorder %s24, 2
          %s1419 = scalar_select %p1418, %s24, 2
          %s1420 = smul.addr %s1419, 8
          %s1421 = scalar_lea.vmem %s11, %s1420
        $region114: #{fast_npss_forward.1} parent=105 // pred_fallthru
          _
      $region106: #{fast_npss_forward.1} parent=5 // pred_fallthru
        _
    $region6: #{fast_npss_forward.1} parent=1 // loop_footer
      %s22 = sadd.s32 1, %s18
    $region7: #{fast_npss_forward.1} parent=1 // loop_footer_branch
      %17 = sbr.rel target = $region3
    $region8: #{fast_npss_forward.1} parent=1 // loop_exit
      _

</llo_original>
